<compile_context>
chip_gen: v7x
topology: tpu7x:2x2x1
jax: 0.10.0
libtpu: 0.0.40
codegen_flags: <defaults>
</compile_context>

<pallas_src>
import functools
import math

import jax
import jax.numpy as jnp
from jax.experimental import pallas as pl
from jax.experimental.pallas import tpu as pltpu

HID = 128       # hidden width of predicate_mlp1 / predicate_mlp2
OUT_HID = 512   # hidden width of out_mlp1


def _setconv_kernel(x_ref, w1_ref, b1_ref, w2_ref, b2_ref, w3_ref, b3_ref,
                    w4_ref, b4_ref, out_ref, *, TB, S, P, L):
    # x_ref: (TB*S, P*L) f32 rows ordered (b, s); weights (in, out); biases (1, out).
    x = x_ref[...]
    w1 = w1_ref[...]            # (L, HID)   bf16
    b1 = b1_ref[...]            # (1, HID)   f32
    w2 = w2_ref[...]            # (HID, HID) bf16
    b2 = b2_ref[...]            # (1, HID)   f32

    hs_parts = []
    for p in range(P):          # static, P is small
        # Static lane slice: predicate p's L features of every (b, s) row.
        xp = x[:, p * L:(p + 1) * L].astype(jnp.bfloat16)            # (TB*S, L)
        # predicate_mlp1 + relu (bf16 MXU, f32 accumulate)
        h = jnp.dot(xp, w1, preferred_element_type=jnp.float32) + b1
        h = jnp.maximum(h, 0.0)
        # predicate_mlp2 + relu
        h = jnp.dot(h.astype(jnp.bfloat16), w2,
                    preferred_element_type=jnp.float32) + b2
        h = jnp.maximum(h, 0.0)                                      # (TB*S, HID) f32
        # torch.sum(dim=1): reduce the S rows of each batch element (sublane reduce).
        hs_parts.append(h.reshape(TB, S, HID).sum(axis=1))           # (TB, HID)

    # torch.flatten(start_dim=1): concat per-predicate features along lanes.
    hs = jnp.concatenate(hs_parts, axis=-1)                          # (TB, P*HID) f32

    # out_mlp1: single deep-K matmul (K = P*HID) + bias + relu.
    o = jnp.dot(hs.astype(jnp.bfloat16), w3_ref[...],
                preferred_element_type=jnp.float32) + b3_ref[...]
    o = jnp.maximum(o, 0.0)                                          # (TB, OUT_HID) f32

    # out_mlp2 (out width 1): VPU multiply + lane reduction, then sigmoid.
    logits = jnp.sum(o * w4_ref[...], axis=-1, keepdims=True) + b4_ref[...]
    out_ref[...] = jax.nn.sigmoid(logits)                            # (TB, 1)


def _choose_batch_tile(B, S, target_rows=1024):
    """Batch tile so that TB*S ~ target_rows and block shapes stay (8,128)-legal."""
    tb = max(1, target_rows // max(S, 1))
    if tb >= B:
        return B                      # single block: block dims == full dims (legal)
    return max(8, (tb // 8) * 8)      # multiple of 8 -> clean sublane tiling


def setconv_forward(predicates, kparams, *, row_tile_target=1024):
    """Pallas forward. predicates: (B, S, P, L) f32; kparams from prepare_kernel_params."""
    B, S, P, L = predicates.shape
    TB = _choose_batch_tile(B, S, row_tile_target)
    NB = -(-B // TB)
    B_pad = NB * TB
    RT, PL = TB * S, P * L

    # Free row-major reshape -- no HBM transpose pass before the kernel.
    x2d = predicates.reshape(B * S, PL)
    if B_pad != B:
        x2d = jnp.pad(x2d, ((0, (B_pad - B) * S), (0, 0)))

    kernel = functools.partial(_setconv_kernel, TB=TB, S=S, P=P, L=L)

    flops = (2 * B * S * P * (L * HID + HID * HID)
             + 2 * B * P * HID * OUT_HID + 2 * B * OUT_HID)
    bytes_accessed = (x2d.size * 4 + 2 * (kparams["w1"].size + kparams["w2"].size
                                          + kparams["w3"].size)
                      + 4 * (2 * HID + 2 * OUT_HID + 1) + 4 * B_pad)

    out = pl.pallas_call(
        kernel,
        out_shape=jax.ShapeDtypeStruct((B_pad, 1), jnp.float32),
        grid=(NB,),
        in_specs=[
            pl.BlockSpec((RT, PL), lambda i: (i, 0)),            # input row slab
            pl.BlockSpec((L, HID), lambda i: (0, 0)),            # w1 (resident)
            pl.BlockSpec((1, HID), lambda i: (0, 0)),            # b1
            pl.BlockSpec((HID, HID), lambda i: (0, 0)),          # w2
            pl.BlockSpec((1, HID), lambda i: (0, 0)),            # b2
            pl.BlockSpec((P * HID, OUT_HID), lambda i: (0, 0)),  # w3
            pl.BlockSpec((1, OUT_HID), lambda i: (0, 0)),        # b3
            pl.BlockSpec((1, OUT_HID), lambda i: (0, 0)),        # w4 row (f32, VPU)
            pl.BlockSpec((1, 1), lambda i: (0, 0)),              # b4
        ],
        out_specs=pl.BlockSpec((TB, 1), lambda i: (i, 0)),
        compiler_params=pltpu.CompilerParams(dimension_semantics=("parallel",)),
        cost_estimate=pl.CostEstimate(flops=int(flops), transcendentals=int(B),
                                      bytes_accessed=int(bytes_accessed)),
    )(x2d, kparams["w1"], kparams["b1"], kparams["w2"], kparams["b2"],
      kparams["w3"], kparams["b3"], kparams["w4"], kparams["b4"])
    return out[:B]


def init_setconv_params(key, predicate_num, predicate_length):
    """Deterministic init matching nn.Linear default (uniform +-1/sqrt(fan_in)); torch layout."""
    def linear(k, fan_in, fan_out):
        kw, kb = jax.random.split(k)
        bound = 1.0 / math.sqrt(fan_in)
        w = jax.random.uniform(kw, (fan_out, fan_in), jnp.float32, -bound, bound)
        b = jax.random.uniform(kb, (fan_out,), jnp.float32, -bound, bound)
        return w, b

    k1, k2, k3, k4 = jax.random.split(key, 4)
    p = {}
    p["w1"], p["b1"] = linear(k1, predicate_length, HID)
    p["w2"], p["b2"] = linear(k2, HID, HID)
    p["w3"], p["b3"] = linear(k3, HID * predicate_num, OUT_HID)
    p["w4"], p["b4"] = linear(k4, OUT_HID, 1)
    return p


def prepare_kernel_params(params):
    """One-time conversion: transpose to (in, out), cast matmul weights to bf16."""
    return {
        "w1": params["w1"].T.astype(jnp.bfloat16),                   # (L, HID)
        "b1": params["b1"].reshape(1, HID).astype(jnp.float32),
        "w2": params["w2"].T.astype(jnp.bfloat16),                   # (HID, HID)
        "b2": params["b2"].reshape(1, HID).astype(jnp.float32),
        "w3": params["w3"].T.astype(jnp.bfloat16),                   # (P*HID, OUT_HID)
        "b3": params["b3"].reshape(1, OUT_HID).astype(jnp.float32),
        "w4": params["w4"].reshape(1, OUT_HID).astype(jnp.float32),  # row, used on VPU
        "b4": params["b4"].reshape(1, 1).astype(jnp.float32),
    }


def setconv_reference(predicates, params):
    """Pure-JAX f32 reference mirroring the PyTorch forward exactly."""
    h = jax.nn.relu(jnp.einsum("bspl,hl->bsph", predicates, params["w1"]) + params["b1"])
    h = jax.nn.relu(jnp.einsum("bsph,kh->bspk", h, params["w2"]) + params["b2"])
    h = h.sum(axis=1)                       # (B, P, HID)
    h = h.reshape(h.shape[0], -1)           # (B, P*HID) == torch.flatten(start_dim=1)
    o = jax.nn.relu(h @ params["w3"].T + params["b3"])
    return jax.nn.sigmoid(o @ params["w4"].T + params["b4"])


if __name__ == "__main__":
    key = jax.random.PRNGKey(0)
    kx, kp = jax.random.split(key)

    B, S, P, L = 2, 8, 4, 16   # batch, set axis, predicate_num, predicate_length
    predicates = jax.random.normal(kx, (B, S, P, L), dtype=jnp.float32)
    params = init_setconv_params(kp, predicate_num=P, predicate_length=L)
    kparams = prepare_kernel_params(params)   # amortized once

    fwd = jax.jit(setconv_forward)
    out = jax.block_until_ready(fwd(predicates, kparams))
    ref = setconv_reference(predicates, params)

    assert out.shape == (B, 1), out.shape
    # bf16 MXU matmuls (f32 accumulation) -> loosened tolerance vs the f32 reference.
    assert jnp.allclose(out, ref, atol=3e-2, rtol=3e-2), (out, ref)
    print("KERNEL_OK")
</pallas_src>

<mosaic_0001>
module attributes {stable_mosaic.version = 11 : i64} {
  func.func @_setconv_kernel(%arg0: i32, %arg1: memref<16x64xf32, #tpu.memory_space<vmem>>, %arg2: memref<16x128xbf16, #tpu.memory_space<vmem>>, %arg3: memref<1x128xf32, #tpu.memory_space<vmem>>, %arg4: memref<128x128xbf16, #tpu.memory_space<vmem>>, %arg5: memref<1x128xf32, #tpu.memory_space<vmem>>, %arg6: memref<512x512xbf16, #tpu.memory_space<vmem>>, %arg7: memref<1x512xf32, #tpu.memory_space<vmem>>, %arg8: memref<1x512xf32, #tpu.memory_space<vmem>>, %arg9: memref<1x1xf32, #tpu.memory_space<vmem>>, %arg10: memref<2x1xf32, #tpu.memory_space<vmem>>) attributes {dimension_semantics = [#tpu.dimension_semantics<parallel>], iteration_bounds = array<i64: 1>, scalar_prefetch = 0 : i64, scratch_operands = 0 : i64, tpu.core_type = #tpu.core_type<tc>, window_params = [{transform_indices = @transform_0, window_bounds = array<i64: 16, 64>}, {pipeline_mode = #tpu.pipeline_mode<synchronous>, transform_indices = @transform_1, window_bounds = array<i64: 16, 128>}, {pipeline_mode = #tpu.pipeline_mode<synchronous>, transform_indices = @transform_2, window_bounds = array<i64: 1, 128>}, {pipeline_mode = #tpu.pipeline_mode<synchronous>, transform_indices = @transform_3, window_bounds = array<i64: 128, 128>}, {pipeline_mode = #tpu.pipeline_mode<synchronous>, transform_indices = @transform_4, window_bounds = array<i64: 1, 128>}, {pipeline_mode = #tpu.pipeline_mode<synchronous>, transform_indices = @transform_5, window_bounds = array<i64: 512, 512>}, {pipeline_mode = #tpu.pipeline_mode<synchronous>, transform_indices = @transform_6, window_bounds = array<i64: 1, 512>}, {pipeline_mode = #tpu.pipeline_mode<synchronous>, transform_indices = @transform_7, window_bounds = array<i64: 1, 512>}, {pipeline_mode = #tpu.pipeline_mode<synchronous>, transform_indices = @transform_8, window_bounds = array<i64: 1, 1>}, {transform_indices = @transform_9, window_bounds = array<i64: 2, 1>}]} {
    %c0 = arith.constant 0 : index
    %c0_0 = arith.constant 0 : index
    %0 = vector.load %arg1[%c0, %c0_0] : memref<16x64xf32, #tpu.memory_space<vmem>>, vector<16x64xf32>
    %c0_1 = arith.constant 0 : index
    %c0_2 = arith.constant 0 : index
    %1 = vector.load %arg2[%c0_1, %c0_2] : memref<16x128xbf16, #tpu.memory_space<vmem>>, vector<16x128xbf16>
    %c0_3 = arith.constant 0 : index
    %c0_4 = arith.constant 0 : index
    %2 = vector.load %arg3[%c0_3, %c0_4] : memref<1x128xf32, #tpu.memory_space<vmem>>, vector<1x128xf32>
    %c0_5 = arith.constant 0 : index
    %c0_6 = arith.constant 0 : index
    %3 = vector.load %arg4[%c0_5, %c0_6] : memref<128x128xbf16, #tpu.memory_space<vmem>>, vector<128x128xbf16>
    %c0_7 = arith.constant 0 : index
    %c0_8 = arith.constant 0 : index
    %4 = vector.load %arg5[%c0_7, %c0_8] : memref<1x128xf32, #tpu.memory_space<vmem>>, vector<1x128xf32>
    %5 = vector.extract_strided_slice %0 {offsets = [0, 0], sizes = [16, 16], strides = [1, 1]} : vector<16x64xf32> to vector<16x16xf32>
    %6 = arith.truncf %5 : vector<16x16xf32> to vector<16x16xbf16>
    %cst = arith.constant dense<0.000000e+00> : vector<16x128xf32>
    %7 = tpu.matmul %6, %1, %cst {dimension_numbers = #tpu.dot_dimension_numbers<[1], [0], [0], [1], [0, 0, 1, 1], [], []>} : vector<16x16xbf16>, vector<16x128xbf16>, vector<16x128xf32> -> vector<16x128xf32>
    %8 = vector.broadcast %2 : vector<1x128xf32> to vector<16x128xf32>
    %9 = arith.addf %7, %8 : vector<16x128xf32>
    %cst_9 = arith.constant 0.000000e+00 : f32
    %10 = vector.broadcast %cst_9 : f32 to vector<16x128xf32>
    %11 = arith.maximumf %9, %10 : vector<16x128xf32>
    %12 = arith.truncf %11 : vector<16x128xf32> to vector<16x128xbf16>
    %cst_10 = arith.constant dense<0.000000e+00> : vector<16x128xf32>
    %13 = tpu.matmul %12, %3, %cst_10 {dimension_numbers = #tpu.dot_dimension_numbers<[1], [0], [0], [1], [0, 0, 1, 1], [], []>} : vector<16x128xbf16>, vector<128x128xbf16>, vector<16x128xf32> -> vector<16x128xf32>
    %14 = vector.broadcast %4 : vector<1x128xf32> to vector<16x128xf32>
    %15 = arith.addf %13, %14 : vector<16x128xf32>
    %cst_11 = arith.constant 0.000000e+00 : f32
    %16 = vector.broadcast %cst_11 : f32 to vector<16x128xf32>
    %17 = arith.maximumf %15, %16 : vector<16x128xf32>
    %18 = vector.shape_cast %17 : vector<16x128xf32> to vector<2x8x128xf32>
    %cst_12 = arith.constant dense<0.000000e+00> : vector<2x128xf32>
    %19 = vector.multi_reduction <add>, %18, %cst_12 [1] : vector<2x8x128xf32> to vector<2x128xf32>
    %20 = vector.extract_strided_slice %0 {offsets = [0, 16], sizes = [16, 16], strides = [1, 1]} : vector<16x64xf32> to vector<16x16xf32>
    %21 = arith.truncf %20 : vector<16x16xf32> to vector<16x16xbf16>
    %cst_13 = arith.constant dense<0.000000e+00> : vector<16x128xf32>
    %22 = tpu.matmul %21, %1, %cst_13 {dimension_numbers = #tpu.dot_dimension_numbers<[1], [0], [0], [1], [0, 0, 1, 1], [], []>} : vector<16x16xbf16>, vector<16x128xbf16>, vector<16x128xf32> -> vector<16x128xf32>
    %23 = vector.broadcast %2 : vector<1x128xf32> to vector<16x128xf32>
    %24 = arith.addf %22, %23 : vector<16x128xf32>
    %cst_14 = arith.constant 0.000000e+00 : f32
    %25 = vector.broadcast %cst_14 : f32 to vector<16x128xf32>
    %26 = arith.maximumf %24, %25 : vector<16x128xf32>
    %27 = arith.truncf %26 : vector<16x128xf32> to vector<16x128xbf16>
    %cst_15 = arith.constant dense<0.000000e+00> : vector<16x128xf32>
    %28 = tpu.matmul %27, %3, %cst_15 {dimension_numbers = #tpu.dot_dimension_numbers<[1], [0], [0], [1], [0, 0, 1, 1], [], []>} : vector<16x128xbf16>, vector<128x128xbf16>, vector<16x128xf32> -> vector<16x128xf32>
    %29 = vector.broadcast %4 : vector<1x128xf32> to vector<16x128xf32>
    %30 = arith.addf %28, %29 : vector<16x128xf32>
    %cst_16 = arith.constant 0.000000e+00 : f32
    %31 = vector.broadcast %cst_16 : f32 to vector<16x128xf32>
    %32 = arith.maximumf %30, %31 : vector<16x128xf32>
    %33 = vector.shape_cast %32 : vector<16x128xf32> to vector<2x8x128xf32>
    %cst_17 = arith.constant dense<0.000000e+00> : vector<2x128xf32>
    %34 = vector.multi_reduction <add>, %33, %cst_17 [1] : vector<2x8x128xf32> to vector<2x128xf32>
    %35 = vector.extract_strided_slice %0 {offsets = [0, 32], sizes = [16, 16], strides = [1, 1]} : vector<16x64xf32> to vector<16x16xf32>
    %36 = arith.truncf %35 : vector<16x16xf32> to vector<16x16xbf16>
    %cst_18 = arith.constant dense<0.000000e+00> : vector<16x128xf32>
    %37 = tpu.matmul %36, %1, %cst_18 {dimension_numbers = #tpu.dot_dimension_numbers<[1], [0], [0], [1], [0, 0, 1, 1], [], []>} : vector<16x16xbf16>, vector<16x128xbf16>, vector<16x128xf32> -> vector<16x128xf32>
    %38 = vector.broadcast %2 : vector<1x128xf32> to vector<16x128xf32>
    %39 = arith.addf %37, %38 : vector<16x128xf32>
    %cst_19 = arith.constant 0.000000e+00 : f32
    %40 = vector.broadcast %cst_19 : f32 to vector<16x128xf32>
    %41 = arith.maximumf %39, %40 : vector<16x128xf32>
    %42 = arith.truncf %41 : vector<16x128xf32> to vector<16x128xbf16>
    %cst_20 = arith.constant dense<0.000000e+00> : vector<16x128xf32>
    %43 = tpu.matmul %42, %3, %cst_20 {dimension_numbers = #tpu.dot_dimension_numbers<[1], [0], [0], [1], [0, 0, 1, 1], [], []>} : vector<16x128xbf16>, vector<128x128xbf16>, vector<16x128xf32> -> vector<16x128xf32>
    %44 = vector.broadcast %4 : vector<1x128xf32> to vector<16x128xf32>
    %45 = arith.addf %43, %44 : vector<16x128xf32>
    %cst_21 = arith.constant 0.000000e+00 : f32
    %46 = vector.broadcast %cst_21 : f32 to vector<16x128xf32>
    %47 = arith.maximumf %45, %46 : vector<16x128xf32>
    %48 = vector.shape_cast %47 : vector<16x128xf32> to vector<2x8x128xf32>
    %cst_22 = arith.constant dense<0.000000e+00> : vector<2x128xf32>
    %49 = vector.multi_reduction <add>, %48, %cst_22 [1] : vector<2x8x128xf32> to vector<2x128xf32>
    %50 = vector.extract_strided_slice %0 {offsets = [0, 48], sizes = [16, 16], strides = [1, 1]} : vector<16x64xf32> to vector<16x16xf32>
    %51 = arith.truncf %50 : vector<16x16xf32> to vector<16x16xbf16>
    %cst_23 = arith.constant dense<0.000000e+00> : vector<16x128xf32>
    %52 = tpu.matmul %51, %1, %cst_23 {dimension_numbers = #tpu.dot_dimension_numbers<[1], [0], [0], [1], [0, 0, 1, 1], [], []>} : vector<16x16xbf16>, vector<16x128xbf16>, vector<16x128xf32> -> vector<16x128xf32>
    %53 = vector.broadcast %2 : vector<1x128xf32> to vector<16x128xf32>
    %54 = arith.addf %52, %53 : vector<16x128xf32>
    %cst_24 = arith.constant 0.000000e+00 : f32
    %55 = vector.broadcast %cst_24 : f32 to vector<16x128xf32>
    %56 = arith.maximumf %54, %55 : vector<16x128xf32>
    %57 = arith.truncf %56 : vector<16x128xf32> to vector<16x128xbf16>
    %cst_25 = arith.constant dense<0.000000e+00> : vector<16x128xf32>
    %58 = tpu.matmul %57, %3, %cst_25 {dimension_numbers = #tpu.dot_dimension_numbers<[1], [0], [0], [1], [0, 0, 1, 1], [], []>} : vector<16x128xbf16>, vector<128x128xbf16>, vector<16x128xf32> -> vector<16x128xf32>
    %59 = vector.broadcast %4 : vector<1x128xf32> to vector<16x128xf32>
    %60 = arith.addf %58, %59 : vector<16x128xf32>
    %cst_26 = arith.constant 0.000000e+00 : f32
    %61 = vector.broadcast %cst_26 : f32 to vector<16x128xf32>
    %62 = arith.maximumf %60, %61 : vector<16x128xf32>
    %63 = vector.shape_cast %62 : vector<16x128xf32> to vector<2x8x128xf32>
    %cst_27 = arith.constant dense<0.000000e+00> : vector<2x128xf32>
    %64 = vector.multi_reduction <add>, %63, %cst_27 [1] : vector<2x8x128xf32> to vector<2x128xf32>
    %65 = tpu.concatenate %19, %34, %49, %64 in 1 : vector<2x128xf32>, vector<2x128xf32>, vector<2x128xf32>, vector<2x128xf32> -> vector<2x512xf32>
    %66 = arith.truncf %65 : vector<2x512xf32> to vector<2x512xbf16>
    %c0_28 = arith.constant 0 : index
    %c0_29 = arith.constant 0 : index
    %67 = vector.load %arg6[%c0_28, %c0_29] : memref<512x512xbf16, #tpu.memory_space<vmem>>, vector<512x512xbf16>
    %cst_30 = arith.constant dense<0.000000e+00> : vector<2x512xf32>
    %68 = tpu.matmul %66, %67, %cst_30 {dimension_numbers = #tpu.dot_dimension_numbers<[1], [0], [0], [1], [0, 0, 1, 1], [], []>} : vector<2x512xbf16>, vector<512x512xbf16>, vector<2x512xf32> -> vector<2x512xf32>
    %c0_31 = arith.constant 0 : index
    %c0_32 = arith.constant 0 : index
    %69 = vector.load %arg7[%c0_31, %c0_32] : memref<1x512xf32, #tpu.memory_space<vmem>>, vector<1x512xf32>
    %70 = vector.broadcast %69 : vector<1x512xf32> to vector<2x512xf32>
    %71 = arith.addf %68, %70 : vector<2x512xf32>
    %cst_33 = arith.constant 0.000000e+00 : f32
    %72 = vector.broadcast %cst_33 : f32 to vector<2x512xf32>
    %73 = arith.maximumf %71, %72 : vector<2x512xf32>
    %c0_34 = arith.constant 0 : index
    %c0_35 = arith.constant 0 : index
    %74 = vector.load %arg8[%c0_34, %c0_35] : memref<1x512xf32, #tpu.memory_space<vmem>>, vector<1x512xf32>
    %75 = vector.broadcast %74 : vector<1x512xf32> to vector<2x512xf32>
    %76 = arith.mulf %73, %75 : vector<2x512xf32>
    %cst_36 = arith.constant dense<0.000000e+00> : vector<2xf32>
    %77 = vector.multi_reduction <add>, %76, %cst_36 [1] : vector<2x512xf32> to vector<2xf32>
    %78 = vector.shape_cast %77 : vector<2xf32> to vector<2x1xf32>
    %c0_37 = arith.constant 0 : index
    %c0_38 = arith.constant 0 : index
    %79 = vector.load %arg9[%c0_37, %c0_38] : memref<1x1xf32, #tpu.memory_space<vmem>>, vector<1x1xf32>
    %80 = vector.broadcast %79 : vector<1x1xf32> to vector<2x1xf32>
    %81 = arith.addf %78, %80 : vector<2x1xf32>
    %82 = arith.negf %81 : vector<2x1xf32>
    %83 = math.exp %82 : vector<2x1xf32>
    %cst_39 = arith.constant 1.000000e+00 : f32
    %84 = vector.broadcast %cst_39 : f32 to vector<2x1xf32>
    %85 = arith.addf %84, %83 : vector<2x1xf32>
    %86 = arith.divf %84, %85 : vector<2x1xf32>
    %c0_40 = arith.constant 0 : index
    %c0_41 = arith.constant 0 : index
    %87 = vector.load %arg10[%c0_40, %c0_41] : memref<2x1xf32, #tpu.memory_space<vmem>>, vector<2x1xf32>
    tpu.vector_store %arg10[%c0_40, %c0_41], %86 {strides = array<i32>} : memref<2x1xf32, #tpu.memory_space<vmem>>, vector<2x1xf32>,
    return
  }
  func.func @transform_0(%arg0: i32) -> (i32, i32) {
    %c0_i32 = arith.constant 0 : i32
    %c0_i32_0 = arith.constant 0 : i32
    return %arg0, %c0_i32 : i32, i32
  }
  func.func @transform_1(%arg0: i32) -> (i32, i32) {
    %c0_i32 = arith.constant 0 : i32
    %c0_i32_0 = arith.constant 0 : i32
    %c0_i32_1 = arith.constant 0 : i32
    return %c0_i32, %c0_i32_0 : i32, i32
  }
  func.func @transform_2(%arg0: i32) -> (i32, i32) {
    %c0_i32 = arith.constant 0 : i32
    %c0_i32_0 = arith.constant 0 : i32
    %c0_i32_1 = arith.constant 0 : i32
    return %c0_i32, %c0_i32_0 : i32, i32
  }
  func.func @transform_3(%arg0: i32) -> (i32, i32) {
    %c0_i32 = arith.constant 0 : i32
    %c0_i32_0 = arith.constant 0 : i32
    %c0_i32_1 = arith.constant 0 : i32
    return %c0_i32, %c0_i32_0 : i32, i32
  }
  func.func @transform_4(%arg0: i32) -> (i32, i32) {
    %c0_i32 = arith.constant 0 : i32
    %c0_i32_0 = arith.constant 0 : i32
    %c0_i32_1 = arith.constant 0 : i32
    return %c0_i32, %c0_i32_0 : i32, i32
  }
  func.func @transform_5(%arg0: i32) -> (i32, i32) {
    %c0_i32 = arith.constant 0 : i32
    %c0_i32_0 = arith.constant 0 : i32
    %c0_i32_1 = arith.constant 0 : i32
    return %c0_i32, %c0_i32_0 : i32, i32
  }
  func.func @transform_6(%arg0: i32) -> (i32, i32) {
    %c0_i32 = arith.constant 0 : i32
    %c0_i32_0 = arith.constant 0 : i32
    %c0_i32_1 = arith.constant 0 : i32
    return %c0_i32, %c0_i32_0 : i32, i32
  }
  func.func @transform_7(%arg0: i32) -> (i32, i32) {
    %c0_i32 = arith.constant 0 : i32
    %c0_i32_0 = arith.constant 0 : i32
    %c0_i32_1 = arith.constant 0 : i32
    return %c0_i32, %c0_i32_0 : i32, i32
  }
  func.func @transform_8(%arg0: i32) -> (i32, i32) {
    %c0_i32 = arith.constant 0 : i32
    %c0_i32_0 = arith.constant 0 : i32
    %c0_i32_1 = arith.constant 0 : i32
    return %c0_i32, %c0_i32_0 : i32, i32
  }
  func.func @transform_9(%arg0: i32) -> (i32, i32) {
    %c0_i32 = arith.constant 0 : i32
    %c0_i32_0 = arith.constant 0 : i32
    return %arg0, %c0_i32 : i32, i32
  }
}

</mosaic_0001>

<llo_original>
// kernel: setconv_forward.1
$region0: #{setconv_forward.1}
  #allocation0 [shape = 'u32[]', space=smem, size = 0x4, offset = 0x4, fixed_abs, tag = 'smem constant byte address 0x4 - core index']
  #allocation1 [shape = 'u32[144,128]{1,0:T(1,128)}', space=vmem, size = 0x12000, scoped, tag = 'internal scratch']
  #allocation2 [shape = 'f32[1,1]{1,0:T(1,128)S(1)}', space=vmem, size = 0x200, scoped, tag = 'scoped memory for setconv_forward.1']
  %s0 = inlined_call_operand.vmem [shape: f32[16,64], index: 0, kind: input, shape index: {}]
  %s1 = inlined_call_operand.vmem [shape: bf16[16,128], index: 1, kind: input, shape index: {}]
  %s2 = inlined_call_operand.vmem [shape: f32[1,128], index: 2, kind: input, shape index: {}]
  %s3 = inlined_call_operand.vmem [shape: bf16[128,128], index: 3, kind: input, shape index: {}]
  %s4 = inlined_call_operand.vmem [shape: f32[1,128], index: 4, kind: input, shape index: {}]
  %s5 = inlined_call_operand.hbm [shape: bf16[512,512], index: 5, kind: input, shape index: {}]
  %s6 = inlined_call_operand.vmem [shape: f32[1,512], index: 6, kind: input, shape index: {}]
  %s7 = inlined_call_operand.vmem [shape: f32[1,512], index: 7, kind: input, shape index: {}]
  %s8 = inlined_call_operand.<no memory space> [shape: f32[1,1], index: 8, kind: input, shape index: {}]
  %s9 = inlined_call_operand.vmem [shape: f32[2,1], index: 9, kind: output, shape index: {}]
  %s10 = sld [smem:[#allocation0]]
  $region50: #{setconv_forward.1} parent=0
    _
  %s12 = ssub.s32 1, %s10
  %s13 = scalar_select 0, %s12, %s10
  %v14 = vstv %s8
  %15 = vst [vmem:[#allocation2] sm:$0x1] %v14
  $region1: #{setconv_forward.1} parent=0
    #allocation3 [shape = 'u8[524288]{0}', space=vmem, size = 0x80000, scoped, tag = 'input window, operand 5, single buffered']
    #allocation4 [shape = 's32[1]{0}', space=sflag, size = 0x4, scoped, tag = 'scoped memory for setconv_forward.1']
    %16 = vsyncpa [#allocation4], 0
    // Predicated region
    $region2: #{setconv_forward.1} parent=1 // pred_check
      _
    $region3: #{setconv_forward.1} parent=1 // pred_check_branch
      %18 = sbr.rel (0) target = $region5
    $region4: #{setconv_forward.1} parent=1 // pred_region
      _
    $region5: #{setconv_forward.1} parent=1 // pred_fallthru
      _
    // Predicated region
    $region6: #{setconv_forward.1} parent=1 // pred_check
      _
    $region7: #{setconv_forward.1} parent=1 // pred_check_branch
      %20 = sbr.rel (0) target = $region9
    $region8: #{setconv_forward.1} parent=1 // pred_region
      _
    $region9: #{setconv_forward.1} parent=1 // pred_fallthru
      _
    // Predicated region
    $region10: #{setconv_forward.1} parent=1 // pred_check
      _
    $region11: #{setconv_forward.1} parent=1 // pred_check_branch
      %22 = sbr.rel (0) target = $region13
    $region12: #{setconv_forward.1} parent=1 // pred_region
      _
    $region13: #{setconv_forward.1} parent=1 // pred_fallthru
      _
    // Predicated region
    $region14: #{setconv_forward.1} parent=1 // pred_check
      _
    $region15: #{setconv_forward.1} parent=1 // pred_check_branch
      %24 = sbr.rel (0) target = $region17
    $region16: #{setconv_forward.1} parent=1 // pred_region
      _
    $region17: #{setconv_forward.1} parent=1 // pred_fallthru
      _
    // Predicated region
    $region18: #{setconv_forward.1} parent=1 // pred_check
      _
    $region19: #{setconv_forward.1} parent=1 // pred_check_branch
      %26 = sbr.rel (0) target = $region21
    $region20: #{setconv_forward.1} parent=1 // pred_region
      _
    $region21: #{setconv_forward.1} parent=1 // pred_fallthru
      _
    // Predicated region
    $region22: #{setconv_forward.1} parent=1 // pred_check
      _
    $region23: #{setconv_forward.1} parent=1 // pred_check_branch
      %28 = sbr.rel (0) target = $region25
    $region24: #{setconv_forward.1} parent=1 // pred_region
      %s30 = ssub.s32 16384, 16384
      %31 = vsyncadd [#allocation4], %s30
      %s32 = sshll.u32 [#allocation3], 4
      %s33 = int_to_ptr.vmem [resolvable:$true] %s32
      %38 = dma.hbm_to_vmem [thread:$0]  %s5, 16384, %s33, [#allocation4], 256, 256, 16
    $region25: #{setconv_forward.1} parent=1 // pred_fallthru
      _
    // Predicated region
    $region26: #{setconv_forward.1} parent=1 // pred_check
      _
    $region27: #{setconv_forward.1} parent=1 // pred_check_branch
      %40 = sbr.rel (0) target = $region29
    $region28: #{setconv_forward.1} parent=1 // pred_region
      _
    $region29: #{setconv_forward.1} parent=1 // pred_fallthru
      _
    // Predicated region
    $region30: #{setconv_forward.1} parent=1 // pred_check
      _
    $region31: #{setconv_forward.1} parent=1 // pred_check_branch
      %42 = sbr.rel (0) target = $region33
    $region32: #{setconv_forward.1} parent=1 // pred_region
      _
    $region33: #{setconv_forward.1} parent=1 // pred_fallthru
      _
    // Predicated region
    $region34: #{setconv_forward.1} parent=1 // pred_check
      _
    $region35: #{setconv_forward.1} parent=1 // pred_check_branch
      %44 = sbr.rel (0) target = $region37
    $region36: #{setconv_forward.1} parent=1 // pred_region
      _
    $region37: #{setconv_forward.1} parent=1 // pred_fallthru
      _
    // Predicated region
    $region38: #{setconv_forward.1} parent=1 // pred_check
      _
    $region39: #{setconv_forward.1} parent=1 // pred_check_branch
      %46 = sbr.rel (0) target = $region41
    $region40: #{setconv_forward.1} parent=1 // pred_region
      %47 = dma.done [#allocation4], 16384
    $region41: #{setconv_forward.1} parent=1 // pred_fallthru
      _
    %v49 = vld [vmem:[%s0] sm:$0xff]
    %v50 = vld [vmem:[%s0 + $0x8] sm:$0xff]
    %v51 = vld [vmem:[%s1] sm:$0xf]
    %v52 = vld [vmem:[%s1 + $0x4] sm:$0xf]
    %v53 = vld [vmem:[%s2] sm:$0x1]
    %v54 = vld [vmem:[%s3] sm:$0xf]
    %v55 = vld [vmem:[%s3 + $0x4] sm:$0xf]
    %v56 = vld [vmem:[%s3 + $0x8] sm:$0xf]
    %v57 = vld [vmem:[%s3 + $0xc] sm:$0xf]
    %v58 = vld [vmem:[%s3 + $0x10] sm:$0xf]
    %v59 = vld [vmem:[%s3 + $0x14] sm:$0xf]
    %v60 = vld [vmem:[%s3 + $0x18] sm:$0xf]
    %v61 = vld [vmem:[%s3 + $0x1c] sm:$0xf]
    %v62 = vld [vmem:[%s3 + $0x20] sm:$0xf]
    %v63 = vld [vmem:[%s3 + $0x24] sm:$0xf]
    %v64 = vld [vmem:[%s3 + $0x28] sm:$0xf]
    %v65 = vld [vmem:[%s3 + $0x2c] sm:$0xf]
    %v66 = vld [vmem:[%s3 + $0x30] sm:$0xf]
    %v67 = vld [vmem:[%s3 + $0x34] sm:$0xf]
    %v68 = vld [vmem:[%s3 + $0x38] sm:$0xf]
    %v69 = vld [vmem:[%s3 + $0x3c] sm:$0xf]
    %v70 = vld [vmem:[%s4] sm:$0x1]
    %v71 = vpack.c.bf16 %v50, %v49
    %v73 = vlaneseq
    %v74 = vshrl.u32 %v73, 7
    %v75 = vsub.s32 0, %v74
    %v76 = vrot.slane %v53, %v75
    %v80 = vunpack.c.l.b16 %v51
    %v81 = vunpack.c.l.b16 %v52
    %v82 = vpack.c.b16 %v81, %v80
    %vm84 = vcmask 130048
    %v86 = vsel %vm84, %v71, 0
    %88 = vmatprep.subr.bf16.mxu0 0
    %89 = vmatpush1.bf16.msra.mxu0 %v82
    %90 = vmatprep.subr.bf16.mxu0 0
    %91 = vmatpush1.bf16.msra.mxu0 0
    %92 = vmatprep.subr.bf16.mxu0 0
    %93 = vmatpush1.bf16.msra.mxu0 0
    %94 = vmatprep.subr.bf16.mxu0 0
    %95 = vmatpush1.bf16.msra.mxu0 0
    %96 = vmatprep.subr.bf16.mxu0 0
    %97 = vmatpush1.bf16.msra.mxu0 0
    %98 = vmatprep.subr.bf16.mxu0 0
    %99 = vmatpush1.bf16.msra.mxu0 0
    %100 = vmatprep.subr.bf16.mxu0 0
    %101 = vmatpush1.bf16.msra.mxu0 0
    %102 = vmatprep.subr.bf16.mxu0 0
    %103 = vmatpush1.bf16.msra.mxu0 0
    %104 = vmatprep.subr.bf16.mxu0 0
    %105 = vmatpush1.bf16.msra.mxu0 0
    %106 = vmatprep.subr.bf16.mxu0 0
    %107 = vmatpush1.bf16.msra.mxu0 0
    %108 = vmatprep.subr.bf16.mxu0 0
    %109 = vmatpush1.bf16.msra.mxu0 0
    %110 = vmatprep.subr.bf16.mxu0 0
    %111 = vmatpush1.bf16.msra.mxu0 0
    %112 = vmatprep.subr.bf16.mxu0 0
    %113 = vmatpush1.bf16.msra.mxu0 0
    %114 = vmatprep.subr.bf16.mxu0 0
    %115 = vmatpush1.bf16.msra.mxu0 0
    %116 = vmatprep.subr.bf16.mxu0 0
    %117 = vmatpush1.bf16.msra.mxu0 0
    %118 = vmatprep.subr.bf16.mxu0 0
    %119 = vmatpush1.bf16.msra.mxu0 0
    %120 = vmatprep.mubr.bf16.mxu0 0
    %121 = vmatmul.mubr.bf16.gmra.mrb[0].mxu0 %v86
    %v122 = vpop.f32.mrb[0].mxu0
    %v123 = vadd.f32 %v76, %v122
    %v124 = vpop.f32.mrb[0].mxu0
    %v125 = vpop.f32.mrb[0].mxu0
    %v126 = vadd.f32 %v76, %v125
    %v127 = vpop.f32.mrb[0].mxu0
    %128 = vdwg.mxu0
    %v129 = vmax.f32 %v123, 0.0
    %v130 = vmax.f32 %v126, 0.0
    %v131 = vpack.c.bf16 %v130, %v129
    %v133 = vlaneseq
    %v134 = vshrl.u32 %v133, 7
    %v135 = vsub.s32 0, %v134
    %v136 = vrot.slane %v70, %v135
    %v154 = vunpack.c.l.b16 %v54
    %v155 = vunpack.c.l.b16 %v55
    %v156 = vunpack.c.l.b16 %v56
    %v157 = vunpack.c.l.b16 %v57
    %v158 = vunpack.c.l.b16 %v58
    %v159 = vunpack.c.l.b16 %v59
    %v160 = vunpack.c.l.b16 %v60
    %v161 = vunpack.c.l.b16 %v61
    %v162 = vunpack.c.l.b16 %v62
    %v163 = vunpack.c.l.b16 %v63
    %v164 = vunpack.c.l.b16 %v64
    %v165 = vunpack.c.l.b16 %v65
    %v166 = vunpack.c.l.b16 %v66
    %v167 = vunpack.c.l.b16 %v67
    %v168 = vunpack.c.l.b16 %v68
    %v169 = vunpack.c.l.b16 %v69
    %v170 = vpack.c.b16 %v155, %v154
    %v171 = vpack.c.b16 %v157, %v156
    %v172 = vpack.c.b16 %v159, %v158
    %v173 = vpack.c.b16 %v161, %v160
    %v174 = vpack.c.b16 %v163, %v162
    %v175 = vpack.c.b16 %v165, %v164
    %v176 = vpack.c.b16 %v167, %v166
    %v177 = vpack.c.b16 %v169, %v168
    %186 = vmatprep.subr.bf16.mxu0 0
    %187 = vmatpush1.bf16.msra.mxu0 %v170
    %188 = vmatprep.subr.bf16.mxu0 0
    %189 = vmatpush1.bf16.msra.mxu0 %v171
    %190 = vmatprep.subr.bf16.mxu0 0
    %191 = vmatpush1.bf16.msra.mxu0 %v172
    %192 = vmatprep.subr.bf16.mxu0 0
    %193 = vmatpush1.bf16.msra.mxu0 %v173
    %194 = vmatprep.subr.bf16.mxu0 0
    %195 = vmatpush1.bf16.msra.mxu0 %v174
    %196 = vmatprep.subr.bf16.mxu0 0
    %197 = vmatpush1.bf16.msra.mxu0 %v175
    %198 = vmatprep.subr.bf16.mxu0 0
    %199 = vmatpush1.bf16.msra.mxu0 %v176
    %200 = vmatprep.subr.bf16.mxu0 0
    %201 = vmatpush1.bf16.msra.mxu0 %v177
    %202 = vmatprep.subr.bf16.mxu0 0
    %203 = vmatpush1.bf16.msra.mxu0 0
    %204 = vmatprep.subr.bf16.mxu0 0
    %205 = vmatpush1.bf16.msra.mxu0 0
    %206 = vmatprep.subr.bf16.mxu0 0
    %207 = vmatpush1.bf16.msra.mxu0 0
    %208 = vmatprep.subr.bf16.mxu0 0
    %209 = vmatpush1.bf16.msra.mxu0 0
    %210 = vmatprep.subr.bf16.mxu0 0
    %211 = vmatpush1.bf16.msra.mxu0 0
    %212 = vmatprep.subr.bf16.mxu0 0
    %213 = vmatpush1.bf16.msra.mxu0 0
    %214 = vmatprep.subr.bf16.mxu0 0
    %215 = vmatpush1.bf16.msra.mxu0 0
    %216 = vmatprep.subr.bf16.mxu0 0
    %217 = vmatpush1.bf16.msra.mxu0 0
    %218 = vmatprep.mubr.bf16.mxu0 0
    %219 = vmatmul.mubr.bf16.gmra.mrb[0].mxu0 %v131
    %v220 = vpop.f32.mrb[0].mxu0
    %v221 = vadd.f32 %v136, %v220
    %v222 = vpop.f32.mrb[0].mxu0
    %v223 = vpop.f32.mrb[0].mxu0
    %v224 = vadd.f32 %v136, %v223
    %v225 = vpop.f32.mrb[0].mxu0
    %226 = vdwg.mxu0
    %v227 = vmax.f32 %v221, 0.0
    %v228 = vmax.f32 %v224, 0.0
    %v229 = vrot.slane %v227, 4
    %v230 = vadd.f32 %v227, %v229
    %v231 = vrot.slane %v230, 2
    %v232 = vadd.f32 %v230, %v231
    %v233 = vrot.slane %v232, 1
    %v234 = vadd.f32 %v232, %v233
    %v235 = vrot.slane %v228, 4
    %v236 = vadd.f32 %v228, %v235
    %v237 = vrot.slane %v236, 2
    %v238 = vadd.f32 %v236, %v237
    %v239 = vrot.slane %v238, 1
    %v240 = vadd.f32 %v238, %v239
    %242 = vrot.lane.b32.xlu0 %v71, 112
    %v243 = vpop.permute.xlu0 %242
    %v245 = vsel %vm84, %v243, 0
    %247 = vmatprep.subr.bf16.mxu0 0
    %248 = vmatpush1.bf16.msra.mxu0 %v82
    %249 = vmatprep.subr.bf16.mxu0 0
    %250 = vmatpush1.bf16.msra.mxu0 0
    %251 = vmatprep.subr.bf16.mxu0 0
    %252 = vmatpush1.bf16.msra.mxu0 0
    %253 = vmatprep.subr.bf16.mxu0 0
    %254 = vmatpush1.bf16.msra.mxu0 0
    %255 = vmatprep.subr.bf16.mxu0 0
    %256 = vmatpush1.bf16.msra.mxu0 0
    %257 = vmatprep.subr.bf16.mxu0 0
    %258 = vmatpush1.bf16.msra.mxu0 0
    %259 = vmatprep.subr.bf16.mxu0 0
    %260 = vmatpush1.bf16.msra.mxu0 0
    %261 = vmatprep.subr.bf16.mxu0 0
    %262 = vmatpush1.bf16.msra.mxu0 0
    %263 = vmatprep.subr.bf16.mxu0 0
    %264 = vmatpush1.bf16.msra.mxu0 0
    %265 = vmatprep.subr.bf16.mxu0 0
    %266 = vmatpush1.bf16.msra.mxu0 0
    %267 = vmatprep.subr.bf16.mxu0 0
    %268 = vmatpush1.bf16.msra.mxu0 0
    %269 = vmatprep.subr.bf16.mxu0 0
    %270 = vmatpush1.bf16.msra.mxu0 0
    %271 = vmatprep.subr.bf16.mxu0 0
    %272 = vmatpush1.bf16.msra.mxu0 0
    %273 = vmatprep.subr.bf16.mxu0 0
    %274 = vmatpush1.bf16.msra.mxu0 0
    %275 = vmatprep.subr.bf16.mxu0 0
    %276 = vmatpush1.bf16.msra.mxu0 0
    %277 = vmatprep.subr.bf16.mxu0 0
    %278 = vmatpush1.bf16.msra.mxu0 0
    %279 = vmatprep.mubr.bf16.mxu0 0
    %280 = vmatmul.mubr.bf16.gmra.mrb[0].mxu0 %v245
    %v281 = vpop.f32.mrb[0].mxu0
    %v282 = vadd.f32 %v76, %v281
    %v283 = vpop.f32.mrb[0].mxu0
    %v284 = vpop.f32.mrb[0].mxu0
    %v285 = vadd.f32 %v76, %v284
    %v286 = vpop.f32.mrb[0].mxu0
    %287 = vdwg.mxu0
    %v288 = vmax.f32 %v282, 0.0
    %v289 = vmax.f32 %v285, 0.0
    %v290 = vpack.c.bf16 %v289, %v288
    %291 = vmatprep.subr.bf16.mxu0 0
    %292 = vmatpush1.bf16.msra.mxu0 %v170
    %293 = vmatprep.subr.bf16.mxu0 0
    %294 = vmatpush1.bf16.msra.mxu0 %v171
    %295 = vmatprep.subr.bf16.mxu0 0
    %296 = vmatpush1.bf16.msra.mxu0 %v172
    %297 = vmatprep.subr.bf16.mxu0 0
    %298 = vmatpush1.bf16.msra.mxu0 %v173
    %299 = vmatprep.subr.bf16.mxu0 0
    %300 = vmatpush1.bf16.msra.mxu0 %v174
    %301 = vmatprep.subr.bf16.mxu0 0
    %302 = vmatpush1.bf16.msra.mxu0 %v175
    %303 = vmatprep.subr.bf16.mxu0 0
    %304 = vmatpush1.bf16.msra.mxu0 %v176
    %305 = vmatprep.subr.bf16.mxu0 0
    %306 = vmatpush1.bf16.msra.mxu0 %v177
    %307 = vmatprep.subr.bf16.mxu0 0
    %308 = vmatpush1.bf16.msra.mxu0 0
    %309 = vmatprep.subr.bf16.mxu0 0
    %310 = vmatpush1.bf16.msra.mxu0 0
    %311 = vmatprep.subr.bf16.mxu0 0
    %312 = vmatpush1.bf16.msra.mxu0 0
    %313 = vmatprep.subr.bf16.mxu0 0
    %314 = vmatpush1.bf16.msra.mxu0 0
    %315 = vmatprep.subr.bf16.mxu0 0
    %316 = vmatpush1.bf16.msra.mxu0 0
    %317 = vmatprep.subr.bf16.mxu0 0
    %318 = vmatpush1.bf16.msra.mxu0 0
    %319 = vmatprep.subr.bf16.mxu0 0
    %320 = vmatpush1.bf16.msra.mxu0 0
    %321 = vmatprep.subr.bf16.mxu0 0
    %322 = vmatpush1.bf16.msra.mxu0 0
    %323 = vmatprep.mubr.bf16.mxu0 0
    %324 = vmatmul.mubr.bf16.gmra.mrb[0].mxu0 %v290
    %v325 = vpop.f32.mrb[0].mxu0
    %v326 = vadd.f32 %v136, %v325
    %v327 = vpop.f32.mrb[0].mxu0
    %v328 = vpop.f32.mrb[0].mxu0
    %v329 = vadd.f32 %v136, %v328
    %v330 = vpop.f32.mrb[0].mxu0
    %331 = vdwg.mxu0
    %v332 = vmax.f32 %v326, 0.0
    %v333 = vmax.f32 %v329, 0.0
    %v334 = vrot.slane %v332, 4
    %v335 = vadd.f32 %v332, %v334
    %v336 = vrot.slane %v335, 2
    %v337 = vadd.f32 %v335, %v336
    %v338 = vrot.slane %v337, 1
    %v339 = vadd.f32 %v337, %v338
    %v340 = vrot.slane %v333, 4
    %v341 = vadd.f32 %v333, %v340
    %v342 = vrot.slane %v341, 2
    %v343 = vadd.f32 %v341, %v342
    %v344 = vrot.slane %v343, 1
    %v345 = vadd.f32 %v343, %v344
    %346 = vrot.lane.b32.xlu0 %v71, 96
    %v347 = vpop.permute.xlu0 %346
    %v349 = vsel %vm84, %v347, 0
    %351 = vmatprep.subr.bf16.mxu0 0
    %352 = vmatpush1.bf16.msra.mxu0 %v82
    %353 = vmatprep.subr.bf16.mxu0 0
    %354 = vmatpush1.bf16.msra.mxu0 0
    %355 = vmatprep.subr.bf16.mxu0 0
    %356 = vmatpush1.bf16.msra.mxu0 0
    %357 = vmatprep.subr.bf16.mxu0 0
    %358 = vmatpush1.bf16.msra.mxu0 0
    %359 = vmatprep.subr.bf16.mxu0 0
    %360 = vmatpush1.bf16.msra.mxu0 0
    %361 = vmatprep.subr.bf16.mxu0 0
    %362 = vmatpush1.bf16.msra.mxu0 0
    %363 = vmatprep.subr.bf16.mxu0 0
    %364 = vmatpush1.bf16.msra.mxu0 0
    %365 = vmatprep.subr.bf16.mxu0 0
    %366 = vmatpush1.bf16.msra.mxu0 0
    %367 = vmatprep.subr.bf16.mxu0 0
    %368 = vmatpush1.bf16.msra.mxu0 0
    %369 = vmatprep.subr.bf16.mxu0 0
    %370 = vmatpush1.bf16.msra.mxu0 0
    %371 = vmatprep.subr.bf16.mxu0 0
    %372 = vmatpush1.bf16.msra.mxu0 0
    %373 = vmatprep.subr.bf16.mxu0 0
    %374 = vmatpush1.bf16.msra.mxu0 0
    %375 = vmatprep.subr.bf16.mxu0 0
    %376 = vmatpush1.bf16.msra.mxu0 0
    %377 = vmatprep.subr.bf16.mxu0 0
    %378 = vmatpush1.bf16.msra.mxu0 0
    %379 = vmatprep.subr.bf16.mxu0 0
    %380 = vmatpush1.bf16.msra.mxu0 0
    %381 = vmatprep.subr.bf16.mxu0 0
    %382 = vmatpush1.bf16.msra.mxu0 0
    %383 = vmatprep.mubr.bf16.mxu0 0
    %384 = vmatmul.mubr.bf16.gmra.mrb[0].mxu0 %v349
    %v385 = vpop.f32.mrb[0].mxu0
    %v386 = vadd.f32 %v76, %v385
    %v387 = vpop.f32.mrb[0].mxu0
    %v388 = vpop.f32.mrb[0].mxu0
    %v389 = vadd.f32 %v76, %v388
    %v390 = vpop.f32.mrb[0].mxu0
    %391 = vdwg.mxu0
    %v392 = vmax.f32 %v386, 0.0
    %v393 = vmax.f32 %v389, 0.0
    %v394 = vpack.c.bf16 %v393, %v392
    %395 = vmatprep.subr.bf16.mxu0 0
    %396 = vmatpush1.bf16.msra.mxu0 %v170
    %397 = vmatprep.subr.bf16.mxu0 0
    %398 = vmatpush1.bf16.msra.mxu0 %v171
    %399 = vmatprep.subr.bf16.mxu0 0
    %400 = vmatpush1.bf16.msra.mxu0 %v172
    %401 = vmatprep.subr.bf16.mxu0 0
    %402 = vmatpush1.bf16.msra.mxu0 %v173
    %403 = vmatprep.subr.bf16.mxu0 0
    %404 = vmatpush1.bf16.msra.mxu0 %v174
    %405 = vmatprep.subr.bf16.mxu0 0
    %406 = vmatpush1.bf16.msra.mxu0 %v175
    %407 = vmatprep.subr.bf16.mxu0 0
    %408 = vmatpush1.bf16.msra.mxu0 %v176
    %409 = vmatprep.subr.bf16.mxu0 0
    %410 = vmatpush1.bf16.msra.mxu0 %v177
    %411 = vmatprep.subr.bf16.mxu0 0
    %412 = vmatpush1.bf16.msra.mxu0 0
    %413 = vmatprep.subr.bf16.mxu0 0
    %414 = vmatpush1.bf16.msra.mxu0 0
    %415 = vmatprep.subr.bf16.mxu0 0
    %416 = vmatpush1.bf16.msra.mxu0 0
    %417 = vmatprep.subr.bf16.mxu0 0
    %418 = vmatpush1.bf16.msra.mxu0 0
    %419 = vmatprep.subr.bf16.mxu0 0
    %420 = vmatpush1.bf16.msra.mxu0 0
    %421 = vmatprep.subr.bf16.mxu0 0
    %422 = vmatpush1.bf16.msra.mxu0 0
    %423 = vmatprep.subr.bf16.mxu0 0
    %424 = vmatpush1.bf16.msra.mxu0 0
    %425 = vmatprep.subr.bf16.mxu0 0
    %426 = vmatpush1.bf16.msra.mxu0 0
    %427 = vmatprep.mubr.bf16.mxu0 0
    %428 = vmatmul.mubr.bf16.gmra.mrb[0].mxu0 %v394
    %v429 = vpop.f32.mrb[0].mxu0
    %v430 = vadd.f32 %v136, %v429
    %v431 = vpop.f32.mrb[0].mxu0
    %v432 = vpop.f32.mrb[0].mxu0
    %v433 = vadd.f32 %v136, %v432
    %v434 = vpop.f32.mrb[0].mxu0
    %435 = vdwg.mxu0
    %v436 = vmax.f32 %v430, 0.0
    %v437 = vmax.f32 %v433, 0.0
    %v438 = vrot.slane %v436, 4
    %v439 = vadd.f32 %v436, %v438
    %v440 = vrot.slane %v439, 2
    %v441 = vadd.f32 %v439, %v440
    %v442 = vrot.slane %v441, 1
    %v443 = vadd.f32 %v441, %v442
    %v444 = vrot.slane %v437, 4
    %v445 = vadd.f32 %v437, %v444
    %v446 = vrot.slane %v445, 2
    %v447 = vadd.f32 %v445, %v446
    %v448 = vrot.slane %v447, 1
    %v449 = vadd.f32 %v447, %v448
    %450 = vrot.lane.b32.xlu0 %v71, 80
    %v451 = vpop.permute.xlu0 %450
    %v453 = vsel %vm84, %v451, 0
    %455 = vmatprep.subr.bf16.mxu0 0
    %456 = vmatpush1.bf16.msra.mxu0 %v82
    %457 = vmatprep.subr.bf16.mxu0 0
    %458 = vmatpush1.bf16.msra.mxu0 0
    %459 = vmatprep.subr.bf16.mxu0 0
    %460 = vmatpush1.bf16.msra.mxu0 0
    %461 = vmatprep.subr.bf16.mxu0 0
    %462 = vmatpush1.bf16.msra.mxu0 0
    %463 = vmatprep.subr.bf16.mxu0 0
    %464 = vmatpush1.bf16.msra.mxu0 0
    %465 = vmatprep.subr.bf16.mxu0 0
    %466 = vmatpush1.bf16.msra.mxu0 0
    %467 = vmatprep.subr.bf16.mxu0 0
    %468 = vmatpush1.bf16.msra.mxu0 0
    %469 = vmatprep.subr.bf16.mxu0 0
    %470 = vmatpush1.bf16.msra.mxu0 0
    %471 = vmatprep.subr.bf16.mxu0 0
    %472 = vmatpush1.bf16.msra.mxu0 0
    %473 = vmatprep.subr.bf16.mxu0 0
    %474 = vmatpush1.bf16.msra.mxu0 0
    %475 = vmatprep.subr.bf16.mxu0 0
    %476 = vmatpush1.bf16.msra.mxu0 0
    %477 = vmatprep.subr.bf16.mxu0 0
    %478 = vmatpush1.bf16.msra.mxu0 0
    %479 = vmatprep.subr.bf16.mxu0 0
    %480 = vmatpush1.bf16.msra.mxu0 0
    %481 = vmatprep.subr.bf16.mxu0 0
    %482 = vmatpush1.bf16.msra.mxu0 0
    %483 = vmatprep.subr.bf16.mxu0 0
    %484 = vmatpush1.bf16.msra.mxu0 0
    %485 = vmatprep.subr.bf16.mxu0 0
    %486 = vmatpush1.bf16.msra.mxu0 0
    %487 = vmatprep.mubr.bf16.mxu0 0
    %488 = vmatmul.mubr.bf16.gmra.mrb[0].mxu0 %v453
    %v489 = vpop.f32.mrb[0].mxu0
    %v490 = vadd.f32 %v76, %v489
    %v491 = vpop.f32.mrb[0].mxu0
    %v492 = vpop.f32.mrb[0].mxu0
    %v493 = vadd.f32 %v76, %v492
    %v494 = vpop.f32.mrb[0].mxu0
    %495 = vdwg.mxu0
    %v496 = vmax.f32 %v490, 0.0
    %v497 = vmax.f32 %v493, 0.0
    %v498 = vpack.c.bf16 %v497, %v496
    %499 = vmatprep.subr.bf16.mxu0 0
    %500 = vmatpush1.bf16.msra.mxu0 %v170
    %501 = vmatprep.subr.bf16.mxu0 0
    %502 = vmatpush1.bf16.msra.mxu0 %v171
    %503 = vmatprep.subr.bf16.mxu0 0
    %504 = vmatpush1.bf16.msra.mxu0 %v172
    %505 = vmatprep.subr.bf16.mxu0 0
    %506 = vmatpush1.bf16.msra.mxu0 %v173
    %507 = vmatprep.subr.bf16.mxu0 0
    %508 = vmatpush1.bf16.msra.mxu0 %v174
    %509 = vmatprep.subr.bf16.mxu0 0
    %510 = vmatpush1.bf16.msra.mxu0 %v175
    %511 = vmatprep.subr.bf16.mxu0 0
    %512 = vmatpush1.bf16.msra.mxu0 %v176
    %513 = vmatprep.subr.bf16.mxu0 0
    %514 = vmatpush1.bf16.msra.mxu0 %v177
    %515 = vmatprep.subr.bf16.mxu0 0
    %516 = vmatpush1.bf16.msra.mxu0 0
    %517 = vmatprep.subr.bf16.mxu0 0
    %518 = vmatpush1.bf16.msra.mxu0 0
    %519 = vmatprep.subr.bf16.mxu0 0
    %520 = vmatpush1.bf16.msra.mxu0 0
    %521 = vmatprep.subr.bf16.mxu0 0
    %522 = vmatpush1.bf16.msra.mxu0 0
    %523 = vmatprep.subr.bf16.mxu0 0
    %524 = vmatpush1.bf16.msra.mxu0 0
    %525 = vmatprep.subr.bf16.mxu0 0
    %526 = vmatpush1.bf16.msra.mxu0 0
    %527 = vmatprep.subr.bf16.mxu0 0
    %528 = vmatpush1.bf16.msra.mxu0 0
    %529 = vmatprep.subr.bf16.mxu0 0
    %530 = vmatpush1.bf16.msra.mxu0 0
    %531 = vmatprep.mubr.bf16.mxu0 0
    %532 = vmatmul.mubr.bf16.gmra.mrb[0].mxu0 %v498
    %v533 = vpop.f32.mrb[0].mxu0
    %v534 = vadd.f32 %v136, %v533
    %v535 = vpop.f32.mrb[0].mxu0
    %v536 = vpop.f32.mrb[0].mxu0
    %v537 = vadd.f32 %v136, %v536
    %v538 = vpop.f32.mrb[0].mxu0
    %539 = vdwg.mxu0
    %v540 = vmax.f32 %v534, 0.0
    %v541 = vmax.f32 %v537, 0.0
    %v542 = vrot.slane %v540, 4
    %v543 = vadd.f32 %v540, %v542
    %v544 = vrot.slane %v543, 2
    %v545 = vadd.f32 %v543, %v544
    %v546 = vrot.slane %v545, 1
    %v547 = vadd.f32 %v545, %v546
    %v548 = vrot.slane %v541, 4
    %v549 = vadd.f32 %v541, %v548
    %v550 = vrot.slane %v549, 2
    %v551 = vadd.f32 %v549, %v550
    %v552 = vrot.slane %v551, 1
    %v553 = vadd.f32 %v551, %v552
    %vm556 = vcmask 1041409
    %v557 = vsel %vm556, %v240, %v234
    %v561 = vsel %vm556, %v345, %v339
    %v565 = vsel %vm556, %v449, %v443
    %v569 = vsel %vm556, %v553, %v547
    %v571 = vpack.c.bf16 %v557, %v557
    %v572 = vpack.c.bf16 %v561, %v561
    %v573 = vpack.c.bf16 %v565, %v565
    %v574 = vpack.c.bf16 %v569, %v569
    %v575 = vld [vmem:[#allocation3] sm:$0xff]
    %v576 = vld [vmem:[#allocation3 + $0x8] sm:$0xff]
    %v577 = vld [vmem:[#allocation3 + $0x10] sm:$0xff]
    %v578 = vld [vmem:[#allocation3 + $0x18] sm:$0xff]
    %v579 = vld [vmem:[#allocation3 + $0x20] sm:$0xff]
    %v580 = vld [vmem:[#allocation3 + $0x28] sm:$0xff]
    %v581 = vld [vmem:[#allocation3 + $0x30] sm:$0xff]
    %v582 = vld [vmem:[#allocation3 + $0x38] sm:$0xff]
    %v583 = vld [vmem:[#allocation3 + $0x40] sm:$0xff]
    %v584 = vld [vmem:[#allocation3 + $0x48] sm:$0xff]
    %v585 = vld [vmem:[#allocation3 + $0x50] sm:$0xff]
    %v586 = vld [vmem:[#allocation3 + $0x58] sm:$0xff]
    %v587 = vld [vmem:[#allocation3 + $0x60] sm:$0xff]
    %v588 = vld [vmem:[#allocation3 + $0x68] sm:$0xff]
    %v589 = vld [vmem:[#allocation3 + $0x70] sm:$0xff]
    %v590 = vld [vmem:[#allocation3 + $0x78] sm:$0xff]
    %v591 = vld [vmem:[#allocation3 + $0x80] sm:$0xff]
    %v592 = vld [vmem:[#allocation3 + $0x88] sm:$0xff]
    %v593 = vld [vmem:[#allocation3 + $0x90] sm:$0xff]
    %v594 = vld [vmem:[#allocation3 + $0x98] sm:$0xff]
    %v595 = vld [vmem:[#allocation3 + $0xa0] sm:$0xff]
    %v596 = vld [vmem:[#allocation3 + $0xa8] sm:$0xff]
    %v597 = vld [vmem:[#allocation3 + $0xb0] sm:$0xff]
    %v598 = vld [vmem:[#allocation3 + $0xb8] sm:$0xff]
    %v599 = vld [vmem:[#allocation3 + $0xc0] sm:$0xff]
    %v600 = vld [vmem:[#allocation3 + $0xc8] sm:$0xff]
    %v601 = vld [vmem:[#allocation3 + $0xd0] sm:$0xff]
    %v602 = vld [vmem:[#allocation3 + $0xd8] sm:$0xff]
    %v603 = vld [vmem:[#allocation3 + $0xe0] sm:$0xff]
    %v604 = vld [vmem:[#allocation3 + $0xe8] sm:$0xff]
    %v605 = vld [vmem:[#allocation3 + $0xf0] sm:$0xff]
    %v606 = vld [vmem:[#allocation3 + $0xf8] sm:$0xff]
    %v607 = vld [vmem:[#allocation3 + $0x100] sm:$0xff]
    %v608 = vld [vmem:[#allocation3 + $0x108] sm:$0xff]
    %v609 = vld [vmem:[#allocation3 + $0x110] sm:$0xff]
    %v610 = vld [vmem:[#allocation3 + $0x118] sm:$0xff]
    %v611 = vld [vmem:[#allocation3 + $0x120] sm:$0xff]
    %v612 = vld [vmem:[#allocation3 + $0x128] sm:$0xff]
    %v613 = vld [vmem:[#allocation3 + $0x130] sm:$0xff]
    %v614 = vld [vmem:[#allocation3 + $0x138] sm:$0xff]
    %v615 = vld [vmem:[#allocation3 + $0x140] sm:$0xff]
    %v616 = vld [vmem:[#allocation3 + $0x148] sm:$0xff]
    %v617 = vld [vmem:[#allocation3 + $0x150] sm:$0xff]
    %v618 = vld [vmem:[#allocation3 + $0x158] sm:$0xff]
    %v619 = vld [vmem:[#allocation3 + $0x160] sm:$0xff]
    %v620 = vld [vmem:[#allocation3 + $0x168] sm:$0xff]
    %v621 = vld [vmem:[#allocation3 + $0x170] sm:$0xff]
    %v622 = vld [vmem:[#allocation3 + $0x178] sm:$0xff]
    %v623 = vld [vmem:[#allocation3 + $0x180] sm:$0xff]
    %v624 = vld [vmem:[#allocation3 + $0x188] sm:$0xff]
    %v625 = vld [vmem:[#allocation3 + $0x190] sm:$0xff]
    %v626 = vld [vmem:[#allocation3 + $0x198] sm:$0xff]
    %v627 = vld [vmem:[#allocation3 + $0x1a0] sm:$0xff]
    %v628 = vld [vmem:[#allocation3 + $0x1a8] sm:$0xff]
    %v629 = vld [vmem:[#allocation3 + $0x1b0] sm:$0xff]
    %v630 = vld [vmem:[#allocation3 + $0x1b8] sm:$0xff]
    %v631 = vld [vmem:[#allocation3 + $0x1c0] sm:$0xff]
    %v632 = vld [vmem:[#allocation3 + $0x1c8] sm:$0xff]
    %v633 = vld [vmem:[#allocation3 + $0x1d0] sm:$0xff]
    %v634 = vld [vmem:[#allocation3 + $0x1d8] sm:$0xff]
    %v635 = vld [vmem:[#allocation3 + $0x1e0] sm:$0xff]
    %v636 = vld [vmem:[#allocation3 + $0x1e8] sm:$0xff]
    %v637 = vld [vmem:[#allocation3 + $0x1f0] sm:$0xff]
    %v638 = vld [vmem:[#allocation3 + $0x1f8] sm:$0xff]
    %v639 = vld [vmem:[#allocation3 + $0x200] sm:$0xff]
    %v640 = vld [vmem:[#allocation3 + $0x208] sm:$0xff]
    %v641 = vld [vmem:[#allocation3 + $0x210] sm:$0xff]
    %v642 = vld [vmem:[#allocation3 + $0x218] sm:$0xff]
    %v643 = vld [vmem:[#allocation3 + $0x220] sm:$0xff]
    %v644 = vld [vmem:[#allocation3 + $0x228] sm:$0xff]
    %v645 = vld [vmem:[#allocation3 + $0x230] sm:$0xff]
    %v646 = vld [vmem:[#allocation3 + $0x238] sm:$0xff]
    %v647 = vld [vmem:[#allocation3 + $0x240] sm:$0xff]
    %v648 = vld [vmem:[#allocation3 + $0x248] sm:$0xff]
    %v649 = vld [vmem:[#allocation3 + $0x250] sm:$0xff]
    %v650 = vld [vmem:[#allocation3 + $0x258] sm:$0xff]
    %v651 = vld [vmem:[#allocation3 + $0x260] sm:$0xff]
    %v652 = vld [vmem:[#allocation3 + $0x268] sm:$0xff]
    %v653 = vld [vmem:[#allocation3 + $0x270] sm:$0xff]
    %v654 = vld [vmem:[#allocation3 + $0x278] sm:$0xff]
    %v655 = vld [vmem:[#allocation3 + $0x280] sm:$0xff]
    %v656 = vld [vmem:[#allocation3 + $0x288] sm:$0xff]
    %v657 = vld [vmem:[#allocation3 + $0x290] sm:$0xff]
    %v658 = vld [vmem:[#allocation3 + $0x298] sm:$0xff]
    %v659 = vld [vmem:[#allocation3 + $0x2a0] sm:$0xff]
    %v660 = vld [vmem:[#allocation3 + $0x2a8] sm:$0xff]
    %v661 = vld [vmem:[#allocation3 + $0x2b0] sm:$0xff]
    %v662 = vld [vmem:[#allocation3 + $0x2b8] sm:$0xff]
    %v663 = vld [vmem:[#allocation3 + $0x2c0] sm:$0xff]
    %v664 = vld [vmem:[#allocation3 + $0x2c8] sm:$0xff]
    %v665 = vld [vmem:[#allocation3 + $0x2d0] sm:$0xff]
    %v666 = vld [vmem:[#allocation3 + $0x2d8] sm:$0xff]
    %v667 = vld [vmem:[#allocation3 + $0x2e0] sm:$0xff]
    %v668 = vld [vmem:[#allocation3 + $0x2e8] sm:$0xff]
    %v669 = vld [vmem:[#allocation3 + $0x2f0] sm:$0xff]
    %v670 = vld [vmem:[#allocation3 + $0x2f8] sm:$0xff]
    %v671 = vld [vmem:[#allocation3 + $0x300] sm:$0xff]
    %v672 = vld [vmem:[#allocation3 + $0x308] sm:$0xff]
    %v673 = vld [vmem:[#allocation3 + $0x310] sm:$0xff]
    %v674 = vld [vmem:[#allocation3 + $0x318] sm:$0xff]
    %v675 = vld [vmem:[#allocation3 + $0x320] sm:$0xff]
    %v676 = vld [vmem:[#allocation3 + $0x328] sm:$0xff]
    %v677 = vld [vmem:[#allocation3 + $0x330] sm:$0xff]
    %v678 = vld [vmem:[#allocation3 + $0x338] sm:$0xff]
    %v679 = vld [vmem:[#allocation3 + $0x340] sm:$0xff]
    %v680 = vld [vmem:[#allocation3 + $0x348] sm:$0xff]
    %v681 = vld [vmem:[#allocation3 + $0x350] sm:$0xff]
    %v682 = vld [vmem:[#allocation3 + $0x358] sm:$0xff]
    %v683 = vld [vmem:[#allocation3 + $0x360] sm:$0xff]
    %v684 = vld [vmem:[#allocation3 + $0x368] sm:$0xff]
    %v685 = vld [vmem:[#allocation3 + $0x370] sm:$0xff]
    %v686 = vld [vmem:[#allocation3 + $0x378] sm:$0xff]
    %v687 = vld [vmem:[#allocation3 + $0x380] sm:$0xff]
    %v688 = vld [vmem:[#allocation3 + $0x388] sm:$0xff]
    %v689 = vld [vmem:[#allocation3 + $0x390] sm:$0xff]
    %v690 = vld [vmem:[#allocation3 + $0x398] sm:$0xff]
    %v691 = vld [vmem:[#allocation3 + $0x3a0] sm:$0xff]
    %v692 = vld [vmem:[#allocation3 + $0x3a8] sm:$0xff]
    %v693 = vld [vmem:[#allocation3 + $0x3b0] sm:$0xff]
    %v694 = vld [vmem:[#allocation3 + $0x3b8] sm:$0xff]
    %v695 = vld [vmem:[#allocation3 + $0x3c0] sm:$0xff]
    %v696 = vld [vmem:[#allocation3 + $0x3c8] sm:$0xff]
    %v697 = vld [vmem:[#allocation3 + $0x3d0] sm:$0xff]
    %v698 = vld [vmem:[#allocation3 + $0x3d8] sm:$0xff]
    %v699 = vld [vmem:[#allocation3 + $0x3e0] sm:$0xff]
    %v700 = vld [vmem:[#allocation3 + $0x3e8] sm:$0xff]
    %v701 = vld [vmem:[#allocation3 + $0x3f0] sm:$0xff]
    %v702 = vld [vmem:[#allocation3 + $0x3f8] sm:$0xff]
    %v703 = vld [vmem:[%s6] sm:$0xf]
    %v705 = vlaneseq
    %v706 = vshrl.u32 %v705, 7
    %v707 = vsub.s32 0, %v706
    %v708 = vrot.slane %v703, %v707
    %v709 = vlaneseq
    %v710 = vshrl.u32 %v709, 7
    %v711 = vsub.s32 1, %v710
    %v712 = vrot.slane %v703, %v711
    %v713 = vlaneseq
    %v714 = vshrl.u32 %v713, 7
    %v715 = vsub.s32 2, %v714
    %v716 = vrot.slane %v703, %v715
    %v717 = vlaneseq
    %v718 = vshrl.u32 %v717, 7
    %v719 = vsub.s32 3, %v718
    %v720 = vrot.slane %v703, %v719
    %v853 = vunpack.c.l.b16 %v575
    %v854 = vunpack.c.h.b16 %v575
    %v855 = vunpack.c.l.b16 %v576
    %v856 = vunpack.c.h.b16 %v576
    %v857 = vunpack.c.l.b16 %v577
    %v858 = vunpack.c.h.b16 %v577
    %v859 = vunpack.c.l.b16 %v578
    %v860 = vunpack.c.h.b16 %v578
    %v861 = vunpack.c.l.b16 %v579
    %v862 = vunpack.c.h.b16 %v579
    %v863 = vunpack.c.l.b16 %v580
    %v864 = vunpack.c.h.b16 %v580
    %v865 = vunpack.c.l.b16 %v581
    %v866 = vunpack.c.h.b16 %v581
    %v867 = vunpack.c.l.b16 %v582
    %v868 = vunpack.c.h.b16 %v582
    %v869 = vunpack.c.l.b16 %v583
    %v870 = vunpack.c.h.b16 %v583
    %v871 = vunpack.c.l.b16 %v584
    %v872 = vunpack.c.h.b16 %v584
    %v873 = vunpack.c.l.b16 %v585
    %v874 = vunpack.c.h.b16 %v585
    %v875 = vunpack.c.l.b16 %v586
    %v876 = vunpack.c.h.b16 %v586
    %v877 = vunpack.c.l.b16 %v587
    %v878 = vunpack.c.h.b16 %v587
    %v879 = vunpack.c.l.b16 %v588
    %v880 = vunpack.c.h.b16 %v588
    %v881 = vunpack.c.l.b16 %v589
    %v882 = vunpack.c.h.b16 %v589
    %v883 = vunpack.c.l.b16 %v590
    %v884 = vunpack.c.h.b16 %v590
    %v885 = vunpack.c.l.b16 %v591
    %v886 = vunpack.c.h.b16 %v591
    %v887 = vunpack.c.l.b16 %v592
    %v888 = vunpack.c.h.b16 %v592
    %v889 = vunpack.c.l.b16 %v593
    %v890 = vunpack.c.h.b16 %v593
    %v891 = vunpack.c.l.b16 %v594
    %v892 = vunpack.c.h.b16 %v594
    %v893 = vunpack.c.l.b16 %v595
    %v894 = vunpack.c.h.b16 %v595
    %v895 = vunpack.c.l.b16 %v596
    %v896 = vunpack.c.h.b16 %v596
    %v897 = vunpack.c.l.b16 %v597
    %v898 = vunpack.c.h.b16 %v597
    %v899 = vunpack.c.l.b16 %v598
    %v900 = vunpack.c.h.b16 %v598
    %v901 = vunpack.c.l.b16 %v599
    %v902 = vunpack.c.h.b16 %v599
    %v903 = vunpack.c.l.b16 %v600
    %v904 = vunpack.c.h.b16 %v600
    %v905 = vunpack.c.l.b16 %v601
    %v906 = vunpack.c.h.b16 %v601
    %v907 = vunpack.c.l.b16 %v602
    %v908 = vunpack.c.h.b16 %v602
    %v909 = vunpack.c.l.b16 %v603
    %v910 = vunpack.c.h.b16 %v603
    %v911 = vunpack.c.l.b16 %v604
    %v912 = vunpack.c.h.b16 %v604
    %v913 = vunpack.c.l.b16 %v605
    %v914 = vunpack.c.h.b16 %v605
    %v915 = vunpack.c.l.b16 %v606
    %v916 = vunpack.c.h.b16 %v606
    %v917 = vunpack.c.l.b16 %v607
    %v918 = vunpack.c.h.b16 %v607
    %v919 = vunpack.c.l.b16 %v608
    %v920 = vunpack.c.h.b16 %v608
    %v921 = vunpack.c.l.b16 %v609
    %v922 = vunpack.c.h.b16 %v609
    %v923 = vunpack.c.l.b16 %v610
    %v924 = vunpack.c.h.b16 %v610
    %v925 = vunpack.c.l.b16 %v611
    %v926 = vunpack.c.h.b16 %v611
    %v927 = vunpack.c.l.b16 %v612
    %v928 = vunpack.c.h.b16 %v612
    %v929 = vunpack.c.l.b16 %v613
    %v930 = vunpack.c.h.b16 %v613
    %v931 = vunpack.c.l.b16 %v614
    %v932 = vunpack.c.h.b16 %v614
    %v933 = vunpack.c.l.b16 %v615
    %v934 = vunpack.c.h.b16 %v615
    %v935 = vunpack.c.l.b16 %v616
    %v936 = vunpack.c.h.b16 %v616
    %v937 = vunpack.c.l.b16 %v617
    %v938 = vunpack.c.h.b16 %v617
    %v939 = vunpack.c.l.b16 %v618
    %v940 = vunpack.c.h.b16 %v618
    %v941 = vunpack.c.l.b16 %v619
    %v942 = vunpack.c.h.b16 %v619
    %v943 = vunpack.c.l.b16 %v620
    %v944 = vunpack.c.h.b16 %v620
    %v945 = vunpack.c.l.b16 %v621
    %v946 = vunpack.c.h.b16 %v621
    %v947 = vunpack.c.l.b16 %v622
    %v948 = vunpack.c.h.b16 %v622
    %v949 = vunpack.c.l.b16 %v623
    %v950 = vunpack.c.h.b16 %v623
    %v951 = vunpack.c.l.b16 %v624
    %v952 = vunpack.c.h.b16 %v624
    %v953 = vunpack.c.l.b16 %v625
    %v954 = vunpack.c.h.b16 %v625
    %v955 = vunpack.c.l.b16 %v626
    %v956 = vunpack.c.h.b16 %v626
    %v957 = vunpack.c.l.b16 %v627
    %v958 = vunpack.c.h.b16 %v627
    %v959 = vunpack.c.l.b16 %v628
    %v960 = vunpack.c.h.b16 %v628
    %v961 = vunpack.c.l.b16 %v629
    %v962 = vunpack.c.h.b16 %v629
    %v963 = vunpack.c.l.b16 %v630
    %v964 = vunpack.c.h.b16 %v630
    %v965 = vunpack.c.l.b16 %v631
    %v966 = vunpack.c.h.b16 %v631
    %v967 = vunpack.c.l.b16 %v632
    %v968 = vunpack.c.h.b16 %v632
    %v969 = vunpack.c.l.b16 %v633
    %v970 = vunpack.c.h.b16 %v633
    %v971 = vunpack.c.l.b16 %v634
    %v972 = vunpack.c.h.b16 %v634
    %v973 = vunpack.c.l.b16 %v635
    %v974 = vunpack.c.h.b16 %v635
    %v975 = vunpack.c.l.b16 %v636
    %v976 = vunpack.c.h.b16 %v636
    %v977 = vunpack.c.l.b16 %v637
    %v978 = vunpack.c.h.b16 %v637
    %v979 = vunpack.c.l.b16 %v638
    %v980 = vunpack.c.h.b16 %v638
    %v981 = vunpack.c.l.b16 %v639
    %v982 = vunpack.c.h.b16 %v639
    %v983 = vunpack.c.l.b16 %v640
    %v984 = vunpack.c.h.b16 %v640
    %v985 = vunpack.c.l.b16 %v641
    %v986 = vunpack.c.h.b16 %v641
    %v987 = vunpack.c.l.b16 %v642
    %v988 = vunpack.c.h.b16 %v642
    %v989 = vunpack.c.l.b16 %v643
    %v990 = vunpack.c.h.b16 %v643
    %v991 = vunpack.c.l.b16 %v644
    %v992 = vunpack.c.h.b16 %v644
    %v993 = vunpack.c.l.b16 %v645
    %v994 = vunpack.c.h.b16 %v645
    %v995 = vunpack.c.l.b16 %v646
    %v996 = vunpack.c.h.b16 %v646
    %v997 = vunpack.c.l.b16 %v647
    %v998 = vunpack.c.h.b16 %v647
    %v999 = vunpack.c.l.b16 %v648
    %v1000 = vunpack.c.h.b16 %v648
    %v1001 = vunpack.c.l.b16 %v649
    %v1002 = vunpack.c.h.b16 %v649
    %v1003 = vunpack.c.l.b16 %v650
    %v1004 = vunpack.c.h.b16 %v650
    %v1005 = vunpack.c.l.b16 %v651
    %v1006 = vunpack.c.h.b16 %v651
    %v1007 = vunpack.c.l.b16 %v652
    %v1008 = vunpack.c.h.b16 %v652
    %v1009 = vunpack.c.l.b16 %v653
    %v1010 = vunpack.c.h.b16 %v653
    %v1011 = vunpack.c.l.b16 %v654
    %v1012 = vunpack.c.h.b16 %v654
    %v1013 = vunpack.c.l.b16 %v655
    %v1014 = vunpack.c.h.b16 %v655
    %v1015 = vunpack.c.l.b16 %v656
    %v1016 = vunpack.c.h.b16 %v656
    %v1017 = vunpack.c.l.b16 %v657
    %v1018 = vunpack.c.h.b16 %v657
    %v1019 = vunpack.c.l.b16 %v658
    %v1020 = vunpack.c.h.b16 %v658
    %v1021 = vunpack.c.l.b16 %v659
    %v1022 = vunpack.c.h.b16 %v659
    %v1023 = vunpack.c.l.b16 %v660
    %v1024 = vunpack.c.h.b16 %v660
    %v1025 = vunpack.c.l.b16 %v661
    %v1026 = vunpack.c.h.b16 %v661
    %v1027 = vunpack.c.l.b16 %v662
    %v1028 = vunpack.c.h.b16 %v662
    %v1029 = vunpack.c.l.b16 %v663
    %v1030 = vunpack.c.h.b16 %v663
    %v1031 = vunpack.c.l.b16 %v664
    %v1032 = vunpack.c.h.b16 %v664
    %v1033 = vunpack.c.l.b16 %v665
    %v1034 = vunpack.c.h.b16 %v665
    %v1035 = vunpack.c.l.b16 %v666
    %v1036 = vunpack.c.h.b16 %v666
    %v1037 = vunpack.c.l.b16 %v667
    %v1038 = vunpack.c.h.b16 %v667
    %v1039 = vunpack.c.l.b16 %v668
    %v1040 = vunpack.c.h.b16 %v668
    %v1041 = vunpack.c.l.b16 %v669
    %v1042 = vunpack.c.h.b16 %v669
    %v1043 = vunpack.c.l.b16 %v670
    %v1044 = vunpack.c.h.b16 %v670
    %v1045 = vunpack.c.l.b16 %v671
    %v1046 = vunpack.c.h.b16 %v671
    %v1047 = vunpack.c.l.b16 %v672
    %v1048 = vunpack.c.h.b16 %v672
    %v1049 = vunpack.c.l.b16 %v673
    %v1050 = vunpack.c.h.b16 %v673
    %v1051 = vunpack.c.l.b16 %v674
    %v1052 = vunpack.c.h.b16 %v674
    %v1053 = vunpack.c.l.b16 %v675
    %v1054 = vunpack.c.h.b16 %v675
    %v1055 = vunpack.c.l.b16 %v676
    %v1056 = vunpack.c.h.b16 %v676
    %v1057 = vunpack.c.l.b16 %v677
    %v1058 = vunpack.c.h.b16 %v677
    %v1059 = vunpack.c.l.b16 %v678
    %v1060 = vunpack.c.h.b16 %v678
    %v1061 = vunpack.c.l.b16 %v679
    %v1062 = vunpack.c.h.b16 %v679
    %v1063 = vunpack.c.l.b16 %v680
    %v1064 = vunpack.c.h.b16 %v680
    %v1065 = vunpack.c.l.b16 %v681
    %v1066 = vunpack.c.h.b16 %v681
    %v1067 = vunpack.c.l.b16 %v682
    %v1068 = vunpack.c.h.b16 %v682
    %v1069 = vunpack.c.l.b16 %v683
    %v1070 = vunpack.c.h.b16 %v683
    %v1071 = vunpack.c.l.b16 %v684
    %v1072 = vunpack.c.h.b16 %v684
    %v1073 = vunpack.c.l.b16 %v685
    %v1074 = vunpack.c.h.b16 %v685
    %v1075 = vunpack.c.l.b16 %v686
    %v1076 = vunpack.c.h.b16 %v686
    %v1077 = vunpack.c.l.b16 %v687
    %v1078 = vunpack.c.h.b16 %v687
    %v1079 = vunpack.c.l.b16 %v688
    %v1080 = vunpack.c.h.b16 %v688
    %v1081 = vunpack.c.l.b16 %v689
    %v1082 = vunpack.c.h.b16 %v689
    %v1083 = vunpack.c.l.b16 %v690
    %v1084 = vunpack.c.h.b16 %v690
    %v1085 = vunpack.c.l.b16 %v691
    %v1086 = vunpack.c.h.b16 %v691
    %v1087 = vunpack.c.l.b16 %v692
    %v1088 = vunpack.c.h.b16 %v692
    %v1089 = vunpack.c.l.b16 %v693
    %v1090 = vunpack.c.h.b16 %v693
    %v1091 = vunpack.c.l.b16 %v694
    %v1092 = vunpack.c.h.b16 %v694
    %v1093 = vunpack.c.l.b16 %v695
    %v1094 = vunpack.c.h.b16 %v695
    %v1095 = vunpack.c.l.b16 %v696
    %v1096 = vunpack.c.h.b16 %v696
    %v1097 = vunpack.c.l.b16 %v697
    %v1098 = vunpack.c.h.b16 %v697
    %v1099 = vunpack.c.l.b16 %v698
    %v1100 = vunpack.c.h.b16 %v698
    %v1101 = vunpack.c.l.b16 %v699
    %v1102 = vunpack.c.h.b16 %v699
    %v1103 = vunpack.c.l.b16 %v700
    %v1104 = vunpack.c.h.b16 %v700
    %v1105 = vunpack.c.l.b16 %v701
    %v1106 = vunpack.c.h.b16 %v701
    %v1107 = vunpack.c.l.b16 %v702
    %v1108 = vunpack.c.h.b16 %v702
    %v1109 = vpack.c.b16 %v857, %v853
    %v1110 = vpack.c.b16 %v858, %v854
    %v1111 = vpack.c.b16 %v859, %v855
    %v1112 = vpack.c.b16 %v860, %v856
    %v1113 = vpack.c.b16 %v865, %v861
    %v1114 = vpack.c.b16 %v866, %v862
    %v1115 = vpack.c.b16 %v867, %v863
    %v1116 = vpack.c.b16 %v868, %v864
    %v1117 = vpack.c.b16 %v873, %v869
    %v1118 = vpack.c.b16 %v874, %v870
    %v1119 = vpack.c.b16 %v875, %v871
    %v1120 = vpack.c.b16 %v876, %v872
    %v1121 = vpack.c.b16 %v881, %v877
    %v1122 = vpack.c.b16 %v882, %v878
    %v1123 = vpack.c.b16 %v883, %v879
    %v1124 = vpack.c.b16 %v884, %v880
    %v1125 = vpack.c.b16 %v889, %v885
    %v1126 = vpack.c.b16 %v890, %v886
    %v1127 = vpack.c.b16 %v891, %v887
    %v1128 = vpack.c.b16 %v892, %v888
    %v1129 = vpack.c.b16 %v897, %v893
    %v1130 = vpack.c.b16 %v898, %v894
    %v1131 = vpack.c.b16 %v899, %v895
    %v1132 = vpack.c.b16 %v900, %v896
    %v1133 = vpack.c.b16 %v905, %v901
    %v1134 = vpack.c.b16 %v906, %v902
    %v1135 = vpack.c.b16 %v907, %v903
    %v1136 = vpack.c.b16 %v908, %v904
    %v1137 = vpack.c.b16 %v913, %v909
    %v1138 = vpack.c.b16 %v914, %v910
    %v1139 = vpack.c.b16 %v915, %v911
    %v1140 = vpack.c.b16 %v916, %v912
    %v1141 = vpack.c.b16 %v921, %v917
    %v1142 = vpack.c.b16 %v922, %v918
    %v1143 = vpack.c.b16 %v923, %v919
    %v1144 = vpack.c.b16 %v924, %v920
    %v1145 = vpack.c.b16 %v929, %v925
    %v1146 = vpack.c.b16 %v930, %v926
    %v1147 = vpack.c.b16 %v931, %v927
    %v1148 = vpack.c.b16 %v932, %v928
    %v1149 = vpack.c.b16 %v937, %v933
    %v1150 = vpack.c.b16 %v938, %v934
    %v1151 = vpack.c.b16 %v939, %v935
    %v1152 = vpack.c.b16 %v940, %v936
    %v1153 = vpack.c.b16 %v945, %v941
    %v1154 = vpack.c.b16 %v946, %v942
    %v1155 = vpack.c.b16 %v947, %v943
    %v1156 = vpack.c.b16 %v948, %v944
    %v1157 = vpack.c.b16 %v953, %v949
    %v1158 = vpack.c.b16 %v954, %v950
    %v1159 = vpack.c.b16 %v955, %v951
    %v1160 = vpack.c.b16 %v956, %v952
    %v1161 = vpack.c.b16 %v961, %v957
    %v1162 = vpack.c.b16 %v962, %v958
    %v1163 = vpack.c.b16 %v963, %v959
    %v1164 = vpack.c.b16 %v964, %v960
    %v1165 = vpack.c.b16 %v969, %v965
    %v1166 = vpack.c.b16 %v970, %v966
    %v1167 = vpack.c.b16 %v971, %v967
    %v1168 = vpack.c.b16 %v972, %v968
    %v1169 = vpack.c.b16 %v977, %v973
    %v1170 = vpack.c.b16 %v978, %v974
    %v1171 = vpack.c.b16 %v979, %v975
    %v1172 = vpack.c.b16 %v980, %v976
    %v1173 = vpack.c.b16 %v985, %v981
    %v1174 = vpack.c.b16 %v986, %v982
    %v1175 = vpack.c.b16 %v987, %v983
    %v1176 = vpack.c.b16 %v988, %v984
    %v1177 = vpack.c.b16 %v993, %v989
    %v1178 = vpack.c.b16 %v994, %v990
    %v1179 = vpack.c.b16 %v995, %v991
    %v1180 = vpack.c.b16 %v996, %v992
    %v1181 = vpack.c.b16 %v1001, %v997
    %v1182 = vpack.c.b16 %v1002, %v998
    %v1183 = vpack.c.b16 %v1003, %v999
    %v1184 = vpack.c.b16 %v1004, %v1000
    %v1185 = vpack.c.b16 %v1009, %v1005
    %v1186 = vpack.c.b16 %v1010, %v1006
    %v1187 = vpack.c.b16 %v1011, %v1007
    %v1188 = vpack.c.b16 %v1012, %v1008
    %v1189 = vpack.c.b16 %v1017, %v1013
    %v1190 = vpack.c.b16 %v1018, %v1014
    %v1191 = vpack.c.b16 %v1019, %v1015
    %v1192 = vpack.c.b16 %v1020, %v1016
    %v1193 = vpack.c.b16 %v1025, %v1021
    %v1194 = vpack.c.b16 %v1026, %v1022
    %v1195 = vpack.c.b16 %v1027, %v1023
    %v1196 = vpack.c.b16 %v1028, %v1024
    %v1197 = vpack.c.b16 %v1033, %v1029
    %v1198 = vpack.c.b16 %v1034, %v1030
    %v1199 = vpack.c.b16 %v1035, %v1031
    %v1200 = vpack.c.b16 %v1036, %v1032
    %v1201 = vpack.c.b16 %v1041, %v1037
    %v1202 = vpack.c.b16 %v1042, %v1038
    %v1203 = vpack.c.b16 %v1043, %v1039
    %v1204 = vpack.c.b16 %v1044, %v1040
    %v1205 = vpack.c.b16 %v1049, %v1045
    %v1206 = vpack.c.b16 %v1050, %v1046
    %v1207 = vpack.c.b16 %v1051, %v1047
    %v1208 = vpack.c.b16 %v1052, %v1048
    %v1209 = vpack.c.b16 %v1057, %v1053
    %v1210 = vpack.c.b16 %v1058, %v1054
    %v1211 = vpack.c.b16 %v1059, %v1055
    %v1212 = vpack.c.b16 %v1060, %v1056
    %v1213 = vpack.c.b16 %v1065, %v1061
    %v1214 = vpack.c.b16 %v1066, %v1062
    %v1215 = vpack.c.b16 %v1067, %v1063
    %v1216 = vpack.c.b16 %v1068, %v1064
    %v1217 = vpack.c.b16 %v1073, %v1069
    %v1218 = vpack.c.b16 %v1074, %v1070
    %v1219 = vpack.c.b16 %v1075, %v1071
    %v1220 = vpack.c.b16 %v1076, %v1072
    %v1221 = vpack.c.b16 %v1081, %v1077
    %v1222 = vpack.c.b16 %v1082, %v1078
    %v1223 = vpack.c.b16 %v1083, %v1079
    %v1224 = vpack.c.b16 %v1084, %v1080
    %v1225 = vpack.c.b16 %v1089, %v1085
    %v1226 = vpack.c.b16 %v1090, %v1086
    %v1227 = vpack.c.b16 %v1091, %v1087
    %v1228 = vpack.c.b16 %v1092, %v1088
    %v1229 = vpack.c.b16 %v1097, %v1093
    %v1230 = vpack.c.b16 %v1098, %v1094
    %v1231 = vpack.c.b16 %v1099, %v1095
    %v1232 = vpack.c.b16 %v1100, %v1096
    %v1233 = vpack.c.b16 %v1105, %v1101
    %v1234 = vpack.c.b16 %v1106, %v1102
    %v1235 = vpack.c.b16 %v1107, %v1103
    %v1236 = vpack.c.b16 %v1108, %v1104
    %1365 = vmatprep.subr.bf16.mxu0 %v1110
    %1366 = vmatpush1.bf16.msra.mxu0 %v1109
    %1367 = vmatprep.subr.bf16.mxu0 %v1114
    %1368 = vmatpush1.bf16.msra.mxu0 %v1113
    %1369 = vmatprep.subr.bf16.mxu0 %v1118
    %1370 = vmatpush1.bf16.msra.mxu0 %v1117
    %1371 = vmatprep.subr.bf16.mxu0 %v1122
    %1372 = vmatpush1.bf16.msra.mxu0 %v1121
    %1373 = vmatprep.subr.bf16.mxu0 %v1126
    %1374 = vmatpush1.bf16.msra.mxu0 %v1125
    %1375 = vmatprep.subr.bf16.mxu0 %v1130
    %1376 = vmatpush1.bf16.msra.mxu0 %v1129
    %1377 = vmatprep.subr.bf16.mxu0 %v1134
    %1378 = vmatpush1.bf16.msra.mxu0 %v1133
    %1379 = vmatprep.subr.bf16.mxu0 %v1138
    %1380 = vmatpush1.bf16.msra.mxu0 %v1137
    %1381 = vmatprep.subr.bf16.mxu0 %v1142
    %1382 = vmatpush1.bf16.msra.mxu0 %v1141
    %1383 = vmatprep.subr.bf16.mxu0 %v1146
    %1384 = vmatpush1.bf16.msra.mxu0 %v1145
    %1385 = vmatprep.subr.bf16.mxu0 %v1150
    %1386 = vmatpush1.bf16.msra.mxu0 %v1149
    %1387 = vmatprep.subr.bf16.mxu0 %v1154
    %1388 = vmatpush1.bf16.msra.mxu0 %v1153
    %1389 = vmatprep.subr.bf16.mxu0 %v1158
    %1390 = vmatpush1.bf16.msra.mxu0 %v1157
    %1391 = vmatprep.subr.bf16.mxu0 %v1162
    %1392 = vmatpush1.bf16.msra.mxu0 %v1161
    %1393 = vmatprep.subr.bf16.mxu0 %v1166
    %1394 = vmatpush1.bf16.msra.mxu0 %v1165
    %1395 = vmatprep.subr.bf16.mxu0 %v1170
    %1396 = vmatpush1.bf16.msra.mxu0 %v1169
    %1397 = vmatprep.mubr.bf16.mxu0 %v572
    %1398 = vmatmul.mubr.bf16.gmra.mrb[0].mxu0 %v571
    %v1399 = vpop.f32.mrb[0].mxu0
    %v1400 = vadd.f32 %v708, %v1399
    %v1401 = vpop.f32.mrb[0].mxu0
    %v1402 = vadd.f32 %v712, %v1401
    %v1403 = vpop.f32.mrb[0].mxu0
    %v1404 = vpop.f32.mrb[0].mxu0
    %1405 = vdwg.mxu0
    %1406 = vmatprep.subr.bf16.mxu0 %v1174
    %1407 = vmatpush1.bf16.msra.mxu0 %v1173
    %1408 = vmatprep.subr.bf16.mxu0 %v1178
    %1409 = vmatpush1.bf16.msra.mxu0 %v1177
    %1410 = vmatprep.subr.bf16.mxu0 %v1182
    %1411 = vmatpush1.bf16.msra.mxu0 %v1181
    %1412 = vmatprep.subr.bf16.mxu0 %v1186
    %1413 = vmatpush1.bf16.msra.mxu0 %v1185
    %1414 = vmatprep.subr.bf16.mxu0 %v1190
    %1415 = vmatpush1.bf16.msra.mxu0 %v1189
    %1416 = vmatprep.subr.bf16.mxu0 %v1194
    %1417 = vmatpush1.bf16.msra.mxu0 %v1193
    %1418 = vmatprep.subr.bf16.mxu0 %v1198
    %1419 = vmatpush1.bf16.msra.mxu0 %v1197
    %1420 = vmatprep.subr.bf16.mxu0 %v1202
    %1421 = vmatpush1.bf16.msra.mxu0 %v1201
    %1422 = vmatprep.subr.bf16.mxu0 %v1206
    %1423 = vmatpush1.bf16.msra.mxu0 %v1205
    %1424 = vmatprep.subr.bf16.mxu0 %v1210
    %1425 = vmatpush1.bf16.msra.mxu0 %v1209
    %1426 = vmatprep.subr.bf16.mxu0 %v1214
    %1427 = vmatpush1.bf16.msra.mxu0 %v1213
    %1428 = vmatprep.subr.bf16.mxu0 %v1218
    %1429 = vmatpush1.bf16.msra.mxu0 %v1217
    %1430 = vmatprep.subr.bf16.mxu0 %v1222
    %1431 = vmatpush1.bf16.msra.mxu0 %v1221
    %1432 = vmatprep.subr.bf16.mxu0 %v1226
    %1433 = vmatpush1.bf16.msra.mxu0 %v1225
    %1434 = vmatprep.subr.bf16.mxu0 %v1230
    %1435 = vmatpush1.bf16.msra.mxu0 %v1229
    %1436 = vmatprep.subr.bf16.mxu0 %v1234
    %1437 = vmatpush1.bf16.msra.mxu0 %v1233
    %1438 = vmatprep.mubr.bf16.mxu0 %v574
    %1439 = vmatmul.mubr.bf16.gmra.mrb[0].mxu0 %v573
    %v1440 = vpop.f32.mrb[0].mxu0
    %v1441 = vadd.f32 %v1400, %v1440
    %v1442 = vpop.f32.mrb[0].mxu0
    %v1443 = vadd.f32 %v1402, %v1442
    %v1444 = vpop.f32.mrb[0].mxu0
    %v1445 = vpop.f32.mrb[0].mxu0
    %1446 = vdwg.mxu0
    %1447 = vmatprep.subr.bf16.mxu0 %v1112
    %1448 = vmatpush1.bf16.msra.mxu0 %v1111
    %1449 = vmatprep.subr.bf16.mxu0 %v1116
    %1450 = vmatpush1.bf16.msra.mxu0 %v1115
    %1451 = vmatprep.subr.bf16.mxu0 %v1120
    %1452 = vmatpush1.bf16.msra.mxu0 %v1119
    %1453 = vmatprep.subr.bf16.mxu0 %v1124
    %1454 = vmatpush1.bf16.msra.mxu0 %v1123
    %1455 = vmatprep.subr.bf16.mxu0 %v1128
    %1456 = vmatpush1.bf16.msra.mxu0 %v1127
    %1457 = vmatprep.subr.bf16.mxu0 %v1132
    %1458 = vmatpush1.bf16.msra.mxu0 %v1131
    %1459 = vmatprep.subr.bf16.mxu0 %v1136
    %1460 = vmatpush1.bf16.msra.mxu0 %v1135
    %1461 = vmatprep.subr.bf16.mxu0 %v1140
    %1462 = vmatpush1.bf16.msra.mxu0 %v1139
    %1463 = vmatprep.subr.bf16.mxu0 %v1144
    %1464 = vmatpush1.bf16.msra.mxu0 %v1143
    %1465 = vmatprep.subr.bf16.mxu0 %v1148
    %1466 = vmatpush1.bf16.msra.mxu0 %v1147
    %1467 = vmatprep.subr.bf16.mxu0 %v1152
    %1468 = vmatpush1.bf16.msra.mxu0 %v1151
    %1469 = vmatprep.subr.bf16.mxu0 %v1156
    %1470 = vmatpush1.bf16.msra.mxu0 %v1155
    %1471 = vmatprep.subr.bf16.mxu0 %v1160
    %1472 = vmatpush1.bf16.msra.mxu0 %v1159
    %1473 = vmatprep.subr.bf16.mxu0 %v1164
    %1474 = vmatpush1.bf16.msra.mxu0 %v1163
    %1475 = vmatprep.subr.bf16.mxu0 %v1168
    %1476 = vmatpush1.bf16.msra.mxu0 %v1167
    %1477 = vmatprep.subr.bf16.mxu0 %v1172
    %1478 = vmatpush1.bf16.msra.mxu0 %v1171
    %1479 = vmatprep.mubr.bf16.mxu0 %v572
    %1480 = vmatmul.mubr.bf16.gmra.mrb[0].mxu0 %v571
    %v1481 = vpop.f32.mrb[0].mxu0
    %v1482 = vadd.f32 %v716, %v1481
    %v1483 = vpop.f32.mrb[0].mxu0
    %v1484 = vadd.f32 %v720, %v1483
    %v1485 = vpop.f32.mrb[0].mxu0
    %v1486 = vpop.f32.mrb[0].mxu0
    %1487 = vdwg.mxu0
    %1488 = vmatprep.subr.bf16.mxu0 %v1176
    %1489 = vmatpush1.bf16.msra.mxu0 %v1175
    %1490 = vmatprep.subr.bf16.mxu0 %v1180
    %1491 = vmatpush1.bf16.msra.mxu0 %v1179
    %1492 = vmatprep.subr.bf16.mxu0 %v1184
    %1493 = vmatpush1.bf16.msra.mxu0 %v1183
    %1494 = vmatprep.subr.bf16.mxu0 %v1188
    %1495 = vmatpush1.bf16.msra.mxu0 %v1187
    %1496 = vmatprep.subr.bf16.mxu0 %v1192
    %1497 = vmatpush1.bf16.msra.mxu0 %v1191
    %1498 = vmatprep.subr.bf16.mxu0 %v1196
    %1499 = vmatpush1.bf16.msra.mxu0 %v1195
    %1500 = vmatprep.subr.bf16.mxu0 %v1200
    %1501 = vmatpush1.bf16.msra.mxu0 %v1199
    %1502 = vmatprep.subr.bf16.mxu0 %v1204
    %1503 = vmatpush1.bf16.msra.mxu0 %v1203
    %1504 = vmatprep.subr.bf16.mxu0 %v1208
    %1505 = vmatpush1.bf16.msra.mxu0 %v1207
    %1506 = vmatprep.subr.bf16.mxu0 %v1212
    %1507 = vmatpush1.bf16.msra.mxu0 %v1211
    %1508 = vmatprep.subr.bf16.mxu0 %v1216
    %1509 = vmatpush1.bf16.msra.mxu0 %v1215
    %1510 = vmatprep.subr.bf16.mxu0 %v1220
    %1511 = vmatpush1.bf16.msra.mxu0 %v1219
    %1512 = vmatprep.subr.bf16.mxu0 %v1224
    %1513 = vmatpush1.bf16.msra.mxu0 %v1223
    %1514 = vmatprep.subr.bf16.mxu0 %v1228
    %1515 = vmatpush1.bf16.msra.mxu0 %v1227
    %1516 = vmatprep.subr.bf16.mxu0 %v1232
    %1517 = vmatpush1.bf16.msra.mxu0 %v1231
    %1518 = vmatprep.subr.bf16.mxu0 %v1236
    %1519 = vmatpush1.bf16.msra.mxu0 %v1235
    %1520 = vmatprep.mubr.bf16.mxu0 %v574
    %1521 = vmatmul.mubr.bf16.gmra.mrb[0].mxu0 %v573
    %v1522 = vpop.f32.mrb[0].mxu0
    %v1523 = vadd.f32 %v1482, %v1522
    %v1524 = vpop.f32.mrb[0].mxu0
    %v1525 = vadd.f32 %v1484, %v1524
    %v1526 = vpop.f32.mrb[0].mxu0
    %v1527 = vpop.f32.mrb[0].mxu0
    %1528 = vdwg.mxu0
    %v1529 = vmax.f32 %v1441, 0.0
    %v1530 = vmax.f32 %v1443, 0.0
    %v1531 = vmax.f32 %v1523, 0.0
    %v1532 = vmax.f32 %v1525, 0.0
    %v1533 = vld [vmem:[%s7] sm:$0xf]
    %v1535 = vlaneseq
    %v1536 = vshrl.u32 %v1535, 7
    %v1537 = vsub.s32 0, %v1536
    %v1538 = vrot.slane %v1533, %v1537
    %v1539 = vlaneseq
    %v1540 = vshrl.u32 %v1539, 7
    %v1541 = vsub.s32 1, %v1540
    %v1542 = vrot.slane %v1533, %v1541
    %v1543 = vlaneseq
    %v1544 = vshrl.u32 %v1543, 7
    %v1545 = vsub.s32 2, %v1544
    %v1546 = vrot.slane %v1533, %v1545
    %v1547 = vlaneseq
    %v1548 = vshrl.u32 %v1547, 7
    %v1549 = vsub.s32 3, %v1548
    %v1550 = vrot.slane %v1533, %v1549
    %v1555 = vmul.f32 %v1529, %v1538
    %v1556 = vmul.f32 %v1530, %v1542
    %v1557 = vmul.f32 %v1531, %v1546
    %v1558 = vmul.f32 %v1532, %v1550
    %vm1559 = vcmask 1041408
    %v1560 = vsel %vm1559, %v1555, 0.0
    %v1561 = vsel %vm1559, %v1556, 0.0
    %v1562 = vadd.f32 %v1560, %v1561
    %v1563 = vsel %vm1559, %v1557, 0.0
    %v1564 = vadd.f32 %v1562, %v1563
    %v1565 = vsel %vm1559, %v1558, 0.0
    %v1566 = vadd.f32 %v1564, %v1565
    %1567 = vadd.xlane.f32.xlu0 %v1566
    %v1568 = vpop.xlane.xlu0 %1567
    %v1569 = vld [vmem:[#allocation2] sm:$0x1]
    %v1571 = vlaneseq
    %v1572 = vshrl.u32 %v1571, 7
    %v1573 = vsub.s32 0, %v1572
    %v1574 = vrot.slane %v1569, %v1573
    %v1576 = vadd.f32 %v1568, %v1574
    %v1577 = vxor.u32 %v1576, 2147483648
    %v1578 = vmul.f32 %v1577, 1.442695
    %v1579 = vpow.pop %v1578
    %v1580 = vadd.f32 %v1579, 1.0
    %v1581 = vrcp.pop %v1580
    %v1582 = vmul.f32 1.0, %v1581
    %vm1583 = vcmask 1024
    %1584 = vst.msk [vmem:[%s9] sm:$0x3] %vm1583, %v1582
    // Predicated region
    $region42: #{setconv_forward.1} parent=1 // pred_check
      _
    $region43: #{setconv_forward.1} parent=1 // pred_check_branch
      %1586 = sbr.rel (0) target = $region45
    $region44: #{setconv_forward.1} parent=1 // pred_region
      _
    $region45: #{setconv_forward.1} parent=1 // pred_fallthru
      _
    // Predicated region
    $region46: #{setconv_forward.1} parent=1 // pred_check
      _
    $region47: #{setconv_forward.1} parent=1 // pred_check_branch
      %1588 = sbr.rel (0) target = $region49
    $region48: #{setconv_forward.1} parent=1 // pred_region
      _
    $region49: #{setconv_forward.1} parent=1 // pred_fallthru
      _
    %1589 = vsyncpa [#allocation4], 1

</llo_original>
